<compile_context>
chip_gen: v6e
topology: v6e:2x2x1
jax: 0.10.0
libtpu: 0.0.40
codegen_flags: <defaults>
</compile_context>

<pallas_src>
import functools

import jax
import jax.numpy as jnp
from jax.experimental import pallas as pl
from jax.experimental.pallas import tpu as pltpu


NEG_SLOPE = 0.01     # torch.nn.functional.leaky_relu default
BN_EPS = 1e-5        # nn.BatchNorm1d default
HIDDEN_DIMS = (500, 256, 256, 256, 128)


def _round_up(x, m):
    return (x + m - 1) // m * m


def _elementwise_dtype():
    """bf16 elementwise on chips with a bf16 VPU (v6e/v7x); f32 otherwise."""
    try:
        kind = jax.devices()[0].device_kind.lower()
    except Exception:
        return jnp.float32
    return jnp.bfloat16 if ("v6" in kind or "v7" in kind) else jnp.float32


# ---------------------------------------------------------------------------
# Kernel
# ---------------------------------------------------------------------------
def _mlp_kernel(x_ref, w1, w2, w3, w4, w5, w6, bias_ref, o_ref, *,
                out_dims, out_store, elem_dtype):
    """6 bf16 matmuls (f32 accum) + leaky_relu; BN pre-folded into W/b.

    x_ref is bf16 and is fed straight into the first dot.  Bias add / leaky_relu
    run in `elem_dtype` (bf16 on v6e/v7x, f32 on v5e).  Only the first
    `out_store` columns of the padded head are written back.
    """
    ws = (w1, w2, w3, w4, w5, w6)
    h = x_ref[...]                                     # bf16 (TB, in_pad)
    off = 0
    for i, w in enumerate(ws):
        n = out_dims[i]
        b = bias_ref[:, off:off + n]                   # (1, n) f32, static slice
        acc = jnp.dot(h, w[...], preferred_element_type=jnp.float32)
        if i < 5:
            h = acc.astype(elem_dtype) + b.astype(elem_dtype)
            h = jnp.maximum(h, NEG_SLOPE * h)          # leaky_relu
            h = h.astype(jnp.bfloat16)                 # MXU lhs for next layer
        else:
            h = acc + b                                # final head stays f32
        off += n
    o_ref[...] = jax.nn.sigmoid(h[:, :out_store])      # sig=True


# ---------------------------------------------------------------------------
# Wrapper
# ---------------------------------------------------------------------------
@functools.partial(jax.jit, static_argnames=("out_shape",))
def net_forward(x, weights, bias_packed, *, out_shape=1):
    """weights: tuple of 6 bf16 (in_pad, out_pad) arrays; bias_packed: (1, sum)."""
    in_pad = weights[0].shape[0]
    out_dims = tuple(int(w.shape[1]) for w in weights)
    out_store = _round_up(max(out_shape, 1), 8)        # narrow writeback width
    elem_dtype = _elementwise_dtype()

    B = x.shape[0]
    B_pad8 = _round_up(max(B, 1), 8)
    if B_pad8 <= 256:
        # Latency regime: one tile.
        B_pad, TB = B_pad8, B_pad8
    else:
        # Throughput regime: biggest 128-aligned tile up to 512 rows that still
        # leaves >= 2 grid steps (megacore sharding on v7x).
        B_pad = _round_up(B, 128)
        TB = 128
        for cand in (512, 384, 256):
            if B_pad % cand == 0 and B_pad // cand >= 2:
                TB = cand
                break

    # Pad + cast once (bf16 -> half the input DMA and no in-kernel cast).
    x_bf = x.astype(jnp.bfloat16)
    if B != B_pad or x.shape[1] != in_pad:
        x_bf = jnp.zeros((B_pad, in_pad), jnp.bfloat16).at[:B, :x.shape[1]].set(x_bf)

    grid = (B_pad // TB,)
    kernel = functools.partial(_mlp_kernel, out_dims=out_dims,
                               out_store=out_store, elem_dtype=elem_dtype)

    in_specs = [pl.BlockSpec((TB, in_pad), lambda i: (i, 0))]
    for w in weights:
        in_specs.append(pl.BlockSpec(w.shape, lambda i: (0, 0)))   # resident
    in_specs.append(pl.BlockSpec(bias_packed.shape, lambda i: (0, 0)))

    flops = 2 * B_pad * sum(w.shape[0] * w.shape[1] for w in weights)
    bytes_accessed = (sum(w.size * 2 for w in weights)      # bf16 weights
                      + bias_packed.size * 4                # f32 packed bias
                      + B_pad * in_pad * 2                  # bf16 x
                      + B_pad * out_store * 4)              # f32 narrow output
    cost = pl.CostEstimate(flops=flops,
                           transcendentals=B_pad * out_store,
                           bytes_accessed=bytes_accessed)

    out = pl.pallas_call(
        kernel,
        out_shape=jax.ShapeDtypeStruct((B_pad, out_store), jnp.float32),
        grid=grid,
        in_specs=in_specs,
        out_specs=pl.BlockSpec((TB, out_store), lambda i: (i, 0)),
        compiler_params=pltpu.CompilerParams(
            dimension_semantics=("parallel",)),
        cost_estimate=cost,
    )(x_bf, *weights, bias_packed)

    return out[:B, :out_shape]


# ---------------------------------------------------------------------------
# Parameter construction (torch-like init) + BN folding / padding / packing
# ---------------------------------------------------------------------------
def init_raw_params(key, input_shape, out_shape=1):
    """Linear params (torch uniform +-1/sqrt(fan_in)) and non-trivial BN stats."""
    dims = [input_shape] + list(HIDDEN_DIMS) + [out_shape]
    linears, bns = [], []
    for i in range(6):
        fan_in, fan_out = dims[i], dims[i + 1]
        key, kw, kb = jax.random.split(key, 3)
        bound = 1.0 / float(fan_in) ** 0.5
        w = jax.random.uniform(kw, (fan_in, fan_out), jnp.float32, -bound, bound)
        b = jax.random.uniform(kb, (fan_out,), jnp.float32, -bound, bound)
        linears.append((w, b))
        if i < 5:
            key, kg, kt, km, kv = jax.random.split(key, 5)
            gamma = 1.0 + 0.1 * jax.random.normal(kg, (fan_out,), jnp.float32)
            beta = 0.1 * jax.random.normal(kt, (fan_out,), jnp.float32)
            mean = 0.1 * jax.random.normal(km, (fan_out,), jnp.float32)
            var = jnp.abs(1.0 + 0.1 * jax.random.normal(kv, (fan_out,), jnp.float32))
            bns.append((gamma, beta, mean, var))
    return linears, bns


def fold_and_pack(linears, bns, input_shape, out_shape):
    """Fold BN_i into layer i+1, pad every dim to lane/sublane-friendly sizes,
    cast weights to bf16, pack all biases into one (1, sum) f32 array."""
    in_pads = [_round_up(max(input_shape, 1), 128), 512, 256, 256, 256, 128]
    out_pads = [512, 256, 256, 256, 128, _round_up(max(out_shape, 1), 128)]

    weights, biases = [], []
    for i in range(6):
        w, b = linears[i]
        if i > 0:
            gamma, beta, mean, var = bns[i - 1]
            scale = gamma / jnp.sqrt(var + BN_EPS)
            shift = beta - mean * scale
            b = b + shift @ w                 # uses original w
            w = scale[:, None] * w            # then scale rows
        w_p = jnp.zeros((in_pads[i], out_pads[i]), jnp.float32)
        w_p = w_p.at[:w.shape[0], :w.shape[1]].set(w)
        b_p = jnp.zeros((out_pads[i],), jnp.float32).at[:b.shape[0]].set(b)
        weights.append(w_p.astype(jnp.bfloat16))
        biases.append(b_p)

    bias_packed = jnp.concatenate(biases)[None, :]        # (1, sum_out) f32
    return tuple(weights), bias_packed


# ---------------------------------------------------------------------------
# References
# ---------------------------------------------------------------------------
def reference_forward(x, linears, bns):
    """Original eval-mode semantics in f32 (unfolded BN)."""
    h = x.astype(jnp.float32)
    for i in range(6):
        w, b = linears[i]
        h = h @ w + b
        if i < 5:
            h = jnp.where(h > 0, h, NEG_SLOPE * h)
            gamma, beta, mean, var = bns[i]
            h = (h - mean) / jnp.sqrt(var + BN_EPS) * gamma + beta
            # dropout: identity in eval
    return jax.nn.sigmoid(h)


def folded_reference(x_pad_bf16, weights, bias_packed, elem_dtype):
    """Same folded/mixed-precision math as the kernel (pure JAX)."""
    h = x_pad_bf16
    off = 0
    for i, w in enumerate(weights):
        n = w.shape[1]
        b = bias_packed[:, off:off + n]
        acc = jnp.dot(h, w, preferred_element_type=jnp.float32)
        if i < 5:
            h = acc.astype(elem_dtype) + b.astype(elem_dtype)
            h = jnp.maximum(h, NEG_SLOPE * h)
            h = h.astype(jnp.bfloat16)
        else:
            h = acc + b
        off += n
    return jax.nn.sigmoid(h)


# ---------------------------------------------------------------------------
if __name__ == "__main__":
    key = jax.random.PRNGKey(0)
    k_x, k_p, k_x2 = jax.random.split(key, 3)

    batch, input_shape, out_shape = 8, 32, 1
    x = jax.random.normal(k_x, (batch, input_shape), jnp.float32)

    linears, bns = init_raw_params(k_p, input_shape, out_shape)
    weights, bias_packed = fold_and_pack(linears, bns, input_shape, out_shape)
    elem_dtype = _elementwise_dtype()
    in_pad = weights[0].shape[0]

    # --- small batch (latency path, single tile) ---
    out = net_forward(x, weights, bias_packed, out_shape=out_shape)
    out = jax.block_until_ready(out)
    assert out.shape == (batch, out_shape), out.shape

    # Tight check: kernel vs identical folded mixed-precision math in pure JAX.
    x_pad = jnp.zeros((batch, in_pad), jnp.bfloat16).at[:, :input_shape].set(
        x.astype(jnp.bfloat16))
    ref_f = folded_reference(x_pad, weights, bias_packed, elem_dtype)[:, :out_shape]
    assert jnp.allclose(out, ref_f, atol=3e-3, rtol=3e-3), (
        float(jnp.max(jnp.abs(out - ref_f))))

    # Semantics check vs original f32 eval-mode forward (bf16 path -> loose tol).
    ref = reference_forward(x, linears, bns)
    assert jnp.allclose(out, ref, atol=7e-2, rtol=7e-2), (
        float(jnp.max(jnp.abs(out - ref))))

    # --- large batch (throughput path, TB=512, grid=2) ---
    big_batch = 1024
    x_big = jax.random.normal(k_x2, (big_batch, input_shape), jnp.float32)
    out_big = jax.block_until_ready(
        net_forward(x_big, weights, bias_packed, out_shape=out_shape))
    assert out_big.shape == (big_batch, out_shape), out_big.shape
    x_big_pad = jnp.zeros((big_batch, in_pad), jnp.bfloat16).at[:, :input_shape].set(
        x_big.astype(jnp.bfloat16))
    ref_big = folded_reference(x_big_pad, weights, bias_packed,
                               elem_dtype)[:, :out_shape]
    assert jnp.allclose(out_big, ref_big, atol=3e-3, rtol=3e-3), (
        float(jnp.max(jnp.abs(out_big - ref_big))))

    print("KERNEL_OK")
</pallas_src>

<mosaic_0001>
module attributes {stable_mosaic.version = 11 : i64} {
  func.func @_mlp_kernel(%arg0: i32, %arg1: memref<8x128xbf16, #tpu.memory_space<vmem>>, %arg2: memref<128x512xbf16, #tpu.memory_space<vmem>>, %arg3: memref<512x256xbf16, #tpu.memory_space<vmem>>, %arg4: memref<256x256xbf16, #tpu.memory_space<vmem>>, %arg5: memref<256x256xbf16, #tpu.memory_space<vmem>>, %arg6: memref<256x128xbf16, #tpu.memory_space<vmem>>, %arg7: memref<128x128xbf16, #tpu.memory_space<vmem>>, %arg8: memref<1x1536xf32, #tpu.memory_space<vmem>>, %arg9: memref<8x8xf32, #tpu.memory_space<vmem>>) attributes {dimension_semantics = [#tpu.dimension_semantics<parallel>], iteration_bounds = array<i64: 1>, scalar_prefetch = 0 : i64, scratch_operands = 0 : i64, tpu.core_type = #tpu.core_type<tc>, window_params = [{transform_indices = @transform_0, window_bounds = array<i64: 8, 128>}, {pipeline_mode = #tpu.pipeline_mode<synchronous>, transform_indices = @transform_1, window_bounds = array<i64: 128, 512>}, {pipeline_mode = #tpu.pipeline_mode<synchronous>, transform_indices = @transform_2, window_bounds = array<i64: 512, 256>}, {pipeline_mode = #tpu.pipeline_mode<synchronous>, transform_indices = @transform_3, window_bounds = array<i64: 256, 256>}, {pipeline_mode = #tpu.pipeline_mode<synchronous>, transform_indices = @transform_4, window_bounds = array<i64: 256, 256>}, {pipeline_mode = #tpu.pipeline_mode<synchronous>, transform_indices = @transform_5, window_bounds = array<i64: 256, 128>}, {pipeline_mode = #tpu.pipeline_mode<synchronous>, transform_indices = @transform_6, window_bounds = array<i64: 128, 128>}, {pipeline_mode = #tpu.pipeline_mode<synchronous>, transform_indices = @transform_7, window_bounds = array<i64: 1, 1536>}, {transform_indices = @transform_8, window_bounds = array<i64: 8, 8>}]} {
    %c0 = arith.constant 0 : index
    %c0_0 = arith.constant 0 : index
    %0 = vector.load %arg1[%c0, %c0_0] : memref<8x128xbf16, #tpu.memory_space<vmem>>, vector<8x128xbf16>
    %c0_1 = arith.constant 0 : index
    %c0_2 = arith.constant 0 : index
    %1 = vector.load %arg8[%c0_1, %c0_2] : memref<1x1536xf32, #tpu.memory_space<vmem>>, vector<1x512xf32>
    %c0_3 = arith.constant 0 : index
    %c0_4 = arith.constant 0 : index
    %2 = vector.load %arg2[%c0_3, %c0_4] : memref<128x512xbf16, #tpu.memory_space<vmem>>, vector<128x512xbf16>
    %cst = arith.constant dense<0.000000e+00> : vector<8x512xf32>
    %3 = tpu.matmul %0, %2, %cst {dimension_numbers = #tpu.dot_dimension_numbers<[1], [0], [0], [1], [0, 0, 1, 1], [], []>} : vector<8x128xbf16>, vector<128x512xbf16>, vector<8x512xf32> -> vector<8x512xf32>
    %4 = vector.broadcast %1 : vector<1x512xf32> to vector<8x512xf32>
    %5 = arith.addf %3, %4 : vector<8x512xf32>
    %cst_5 = arith.constant 0.00999999977 : f32
    %6 = vector.broadcast %cst_5 : f32 to vector<8x512xf32>
    %7 = arith.mulf %6, %5 : vector<8x512xf32>
    %8 = arith.maximumf %5, %7 : vector<8x512xf32>
    %9 = arith.truncf %8 : vector<8x512xf32> to vector<8x512xbf16>
    %c0_6 = arith.constant 0 : index
    %c512 = arith.constant 512 : index
    %10 = vector.load %arg8[%c0_6, %c512] : memref<1x1536xf32, #tpu.memory_space<vmem>>, vector<1x256xf32>
    %c0_7 = arith.constant 0 : index
    %c0_8 = arith.constant 0 : index
    %11 = vector.load %arg3[%c0_7, %c0_8] : memref<512x256xbf16, #tpu.memory_space<vmem>>, vector<512x256xbf16>
    %cst_9 = arith.constant dense<0.000000e+00> : vector<8x256xf32>
    %12 = tpu.matmul %9, %11, %cst_9 {dimension_numbers = #tpu.dot_dimension_numbers<[1], [0], [0], [1], [0, 0, 1, 1], [], []>} : vector<8x512xbf16>, vector<512x256xbf16>, vector<8x256xf32> -> vector<8x256xf32>
    %13 = vector.broadcast %10 : vector<1x256xf32> to vector<8x256xf32>
    %14 = arith.addf %12, %13 : vector<8x256xf32>
    %cst_10 = arith.constant 0.00999999977 : f32
    %15 = vector.broadcast %cst_10 : f32 to vector<8x256xf32>
    %16 = arith.mulf %15, %14 : vector<8x256xf32>
    %17 = arith.maximumf %14, %16 : vector<8x256xf32>
    %18 = arith.truncf %17 : vector<8x256xf32> to vector<8x256xbf16>
    %c0_11 = arith.constant 0 : index
    %c768 = arith.constant 768 : index
    %19 = vector.load %arg8[%c0_11, %c768] : memref<1x1536xf32, #tpu.memory_space<vmem>>, vector<1x256xf32>
    %c0_12 = arith.constant 0 : index
    %c0_13 = arith.constant 0 : index
    %20 = vector.load %arg4[%c0_12, %c0_13] : memref<256x256xbf16, #tpu.memory_space<vmem>>, vector<256x256xbf16>
    %cst_14 = arith.constant dense<0.000000e+00> : vector<8x256xf32>
    %21 = tpu.matmul %18, %20, %cst_14 {dimension_numbers = #tpu.dot_dimension_numbers<[1], [0], [0], [1], [0, 0, 1, 1], [], []>} : vector<8x256xbf16>, vector<256x256xbf16>, vector<8x256xf32> -> vector<8x256xf32>
    %22 = vector.broadcast %19 : vector<1x256xf32> to vector<8x256xf32>
    %23 = arith.addf %21, %22 : vector<8x256xf32>
    %cst_15 = arith.constant 0.00999999977 : f32
    %24 = vector.broadcast %cst_15 : f32 to vector<8x256xf32>
    %25 = arith.mulf %24, %23 : vector<8x256xf32>
    %26 = arith.maximumf %23, %25 : vector<8x256xf32>
    %27 = arith.truncf %26 : vector<8x256xf32> to vector<8x256xbf16>
    %c0_16 = arith.constant 0 : index
    %c1024 = arith.constant 1024 : index
    %28 = vector.load %arg8[%c0_16, %c1024] : memref<1x1536xf32, #tpu.memory_space<vmem>>, vector<1x256xf32>
    %c0_17 = arith.constant 0 : index
    %c0_18 = arith.constant 0 : index
    %29 = vector.load %arg5[%c0_17, %c0_18] : memref<256x256xbf16, #tpu.memory_space<vmem>>, vector<256x256xbf16>
    %cst_19 = arith.constant dense<0.000000e+00> : vector<8x256xf32>
    %30 = tpu.matmul %27, %29, %cst_19 {dimension_numbers = #tpu.dot_dimension_numbers<[1], [0], [0], [1], [0, 0, 1, 1], [], []>} : vector<8x256xbf16>, vector<256x256xbf16>, vector<8x256xf32> -> vector<8x256xf32>
    %31 = vector.broadcast %28 : vector<1x256xf32> to vector<8x256xf32>
    %32 = arith.addf %30, %31 : vector<8x256xf32>
    %cst_20 = arith.constant 0.00999999977 : f32
    %33 = vector.broadcast %cst_20 : f32 to vector<8x256xf32>
    %34 = arith.mulf %33, %32 : vector<8x256xf32>
    %35 = arith.maximumf %32, %34 : vector<8x256xf32>
    %36 = arith.truncf %35 : vector<8x256xf32> to vector<8x256xbf16>
    %c0_21 = arith.constant 0 : index
    %c1280 = arith.constant 1280 : index
    %37 = vector.load %arg8[%c0_21, %c1280] : memref<1x1536xf32, #tpu.memory_space<vmem>>, vector<1x128xf32>
    %c0_22 = arith.constant 0 : index
    %c0_23 = arith.constant 0 : index
    %38 = vector.load %arg6[%c0_22, %c0_23] : memref<256x128xbf16, #tpu.memory_space<vmem>>, vector<256x128xbf16>
    %cst_24 = arith.constant dense<0.000000e+00> : vector<8x128xf32>
    %39 = tpu.matmul %36, %38, %cst_24 {dimension_numbers = #tpu.dot_dimension_numbers<[1], [0], [0], [1], [0, 0, 1, 1], [], []>} : vector<8x256xbf16>, vector<256x128xbf16>, vector<8x128xf32> -> vector<8x128xf32>
    %40 = vector.broadcast %37 : vector<1x128xf32> to vector<8x128xf32>
    %41 = arith.addf %39, %40 : vector<8x128xf32>
    %cst_25 = arith.constant 0.00999999977 : f32
    %42 = vector.broadcast %cst_25 : f32 to vector<8x128xf32>
    %43 = arith.mulf %42, %41 : vector<8x128xf32>
    %44 = arith.maximumf %41, %43 : vector<8x128xf32>
    %45 = arith.truncf %44 : vector<8x128xf32> to vector<8x128xbf16>
    %c0_26 = arith.constant 0 : index
    %c1408 = arith.constant 1408 : index
    %46 = vector.load %arg8[%c0_26, %c1408] : memref<1x1536xf32, #tpu.memory_space<vmem>>, vector<1x128xf32>
    %c0_27 = arith.constant 0 : index
    %c0_28 = arith.constant 0 : index
    %47 = vector.load %arg7[%c0_27, %c0_28] : memref<128x128xbf16, #tpu.memory_space<vmem>>, vector<128x128xbf16>
    %cst_29 = arith.constant dense<0.000000e+00> : vector<8x128xf32>
    %48 = tpu.matmul %45, %47, %cst_29 {dimension_numbers = #tpu.dot_dimension_numbers<[1], [0], [0], [1], [0, 0, 1, 1], [], []>} : vector<8x128xbf16>, vector<128x128xbf16>, vector<8x128xf32> -> vector<8x128xf32>
    %49 = vector.broadcast %46 : vector<1x128xf32> to vector<8x128xf32>
    %50 = arith.addf %48, %49 : vector<8x128xf32>
    %51 = vector.extract_strided_slice %50 {offsets = [0, 0], sizes = [8, 8], strides = [1, 1]} : vector<8x128xf32> to vector<8x8xf32>
    %52 = arith.negf %51 : vector<8x8xf32>
    %53 = math.exp %52 : vector<8x8xf32>
    %cst_30 = arith.constant 1.000000e+00 : f32
    %54 = vector.broadcast %cst_30 : f32 to vector<8x8xf32>
    %55 = arith.addf %54, %53 : vector<8x8xf32>
    %56 = arith.divf %54, %55 : vector<8x8xf32>
    %c0_31 = arith.constant 0 : index
    %c0_32 = arith.constant 0 : index
    %57 = vector.load %arg9[%c0_31, %c0_32] : memref<8x8xf32, #tpu.memory_space<vmem>>, vector<8x8xf32>
    tpu.vector_store %arg9[%c0_31, %c0_32], %56 {strides = array<i32>} : memref<8x8xf32, #tpu.memory_space<vmem>>, vector<8x8xf32>,
    return
  }
  func.func @transform_0(%arg0: i32) -> (i32, i32) {
    %c0_i32 = arith.constant 0 : i32
    %c0_i32_0 = arith.constant 0 : i32
    return %arg0, %c0_i32 : i32, i32
  }
  func.func @transform_1(%arg0: i32) -> (i32, i32) {
    %c0_i32 = arith.constant 0 : i32
    %c0_i32_0 = arith.constant 0 : i32
    %c0_i32_1 = arith.constant 0 : i32
    return %c0_i32, %c0_i32_0 : i32, i32
  }
  func.func @transform_2(%arg0: i32) -> (i32, i32) {
    %c0_i32 = arith.constant 0 : i32
    %c0_i32_0 = arith.constant 0 : i32
    %c0_i32_1 = arith.constant 0 : i32
    return %c0_i32, %c0_i32_0 : i32, i32
  }
  func.func @transform_3(%arg0: i32) -> (i32, i32) {
    %c0_i32 = arith.constant 0 : i32
    %c0_i32_0 = arith.constant 0 : i32
    %c0_i32_1 = arith.constant 0 : i32
    return %c0_i32, %c0_i32_0 : i32, i32
  }
  func.func @transform_4(%arg0: i32) -> (i32, i32) {
    %c0_i32 = arith.constant 0 : i32
    %c0_i32_0 = arith.constant 0 : i32
    %c0_i32_1 = arith.constant 0 : i32
    return %c0_i32, %c0_i32_0 : i32, i32
  }
  func.func @transform_5(%arg0: i32) -> (i32, i32) {
    %c0_i32 = arith.constant 0 : i32
    %c0_i32_0 = arith.constant 0 : i32
    %c0_i32_1 = arith.constant 0 : i32
    return %c0_i32, %c0_i32_0 : i32, i32
  }
  func.func @transform_6(%arg0: i32) -> (i32, i32) {
    %c0_i32 = arith.constant 0 : i32
    %c0_i32_0 = arith.constant 0 : i32
    %c0_i32_1 = arith.constant 0 : i32
    return %c0_i32, %c0_i32_0 : i32, i32
  }
  func.func @transform_7(%arg0: i32) -> (i32, i32) {
    %c0_i32 = arith.constant 0 : i32
    %c0_i32_0 = arith.constant 0 : i32
    %c0_i32_1 = arith.constant 0 : i32
    return %c0_i32, %c0_i32_0 : i32, i32
  }
  func.func @transform_8(%arg0: i32) -> (i32, i32) {
    %c0_i32 = arith.constant 0 : i32
    %c0_i32_0 = arith.constant 0 : i32
    return %arg0, %c0_i32 : i32, i32
  }
}

</mosaic_0001>

<llo_original>
// kernel: net_forward.1
$region0: #{net_forward.1}
  #allocation0 [shape = 'u32[]', space=smem, size = 0x4, offset = 0x4, fixed_abs, tag = 'smem constant byte address 0x4 - core index']
  #allocation1 [shape = 'u32[144,128]{1,0:T(1,128)}', space=vmem, size = 0x12000, scoped, tag = 'internal scratch']
  %s0 = inlined_call_operand.vmem [shape: bf16[8,128], index: 0, kind: input, shape index: {}]
  %s1 = inlined_call_operand.hbm [shape: bf16[128,512], index: 1, kind: input, shape index: {}]
  %s2 = inlined_call_operand.hbm [shape: bf16[512,256], index: 2, kind: input, shape index: {}]
  %s3 = inlined_call_operand.hbm [shape: bf16[256,256], index: 3, kind: input, shape index: {}]
  %s4 = inlined_call_operand.hbm [shape: bf16[256,256], index: 4, kind: input, shape index: {}]
  %s5 = inlined_call_operand.hbm [shape: bf16[256,128], index: 5, kind: input, shape index: {}]
  %s6 = inlined_call_operand.hbm [shape: bf16[128,128], index: 6, kind: input, shape index: {}]
  %s7 = inlined_call_operand.vmem [shape: f32[1,1536], index: 7, kind: input, shape index: {}]
  %s8 = inlined_call_operand.vmem [shape: f32[8,8], index: 8, kind: output, shape index: {}]
  %s9 = sld [smem:[#allocation0]]
  $region66: #{net_forward.1} parent=0
    _
  %s11 = ssub.s32 1, %s9
  %s12 = scalar_select 0, %s11, %s9
  $region1: #{net_forward.1} parent=0
    #allocation2 [shape = 'u8[131072]{0}', space=vmem, size = 0x20000, scoped, tag = 'input window, operand 1, single buffered']
    #allocation3 [shape = 's32[1]{0}', space=sflag, size = 0x4, scoped, tag = 'scoped memory for net_forward.1']
    #allocation4 [shape = 'u8[262144]{0}', space=vmem, size = 0x40000, scoped, tag = 'input window, operand 2, single buffered']
    #allocation5 [shape = 's32[1]{0}', space=sflag, size = 0x4, scoped, tag = 'scoped memory for net_forward.1']
    #allocation6 [shape = 'u8[131072]{0}', space=vmem, size = 0x20000, scoped, tag = 'input window, operand 3, single buffered']
    #allocation7 [shape = 'u8[131072]{0}', space=vmem, size = 0x20000, scoped, tag = 'input window, operand 4, single buffered']
    #allocation8 [shape = 's32[1]{0}', space=sflag, size = 0x4, scoped, tag = 'scoped memory for net_forward.1']
    #allocation9 [shape = 'u8[65536]{0}', space=vmem, size = 0x10000, scoped, tag = 'input window, operand 5, single buffered']
    #allocation10 [shape = 'u8[32768]{0}', space=vmem, size = 0x8000, scoped, tag = 'input window, operand 6, single buffered']
    #allocation11 [shape = 's32[1]{0}', space=sflag, size = 0x4, scoped, tag = 'scoped memory for net_forward.1']
    %13 = vsyncpa [#allocation3], 0
    %14 = vsyncpa [#allocation5], 0
    %15 = vsyncpa [#allocation8], 0
    %16 = vsyncpa [#allocation11], 0
    // Predicated region
    $region2: #{net_forward.1} parent=1 // pred_check
      _
    $region3: #{net_forward.1} parent=1 // pred_check_branch
      %18 = sbr.rel (0) target = $region5
    $region4: #{net_forward.1} parent=1 // pred_region
      _
    $region5: #{net_forward.1} parent=1 // pred_fallthru
      _
    // Predicated region
    $region6: #{net_forward.1} parent=1 // pred_check
      _
    $region7: #{net_forward.1} parent=1 // pred_check_branch
      %20 = sbr.rel (0) target = $region9
    $region8: #{net_forward.1} parent=1 // pred_region
      %s22 = ssub.s32 4096, 4096
      %23 = vsyncadd [#allocation3], %s22
      %s24 = sshll.u32 [#allocation2], 4
      %s25 = int_to_ptr.vmem [resolvable:$true] %s24
      %30 = dma.hbm_to_vmem [thread:$0]  %s1, 4096, %s25, [#allocation3], 256, 256, 16
    $region9: #{net_forward.1} parent=1 // pred_fallthru
      _
    // Predicated region
    $region10: #{net_forward.1} parent=1 // pred_check
      _
    $region11: #{net_forward.1} parent=1 // pred_check_branch
      %32 = sbr.rel (0) target = $region13
    $region12: #{net_forward.1} parent=1 // pred_region
      %s34 = ssub.s32 8192, 8192
      %35 = vsyncadd [#allocation5], %s34
      %s36 = sshll.u32 [#allocation4], 4
      %s37 = int_to_ptr.vmem [resolvable:$true] %s36
      %42 = dma.hbm_to_vmem [thread:$0]  %s2, 8192, %s37, [#allocation5], 128, 128, 8
    $region13: #{net_forward.1} parent=1 // pred_fallthru
      _
    // Predicated region
    $region14: #{net_forward.1} parent=1 // pred_check
      _
    $region15: #{net_forward.1} parent=1 // pred_check_branch
      %44 = sbr.rel (0) target = $region17
    $region16: #{net_forward.1} parent=1 // pred_region
      %s46 = ssub.s32 4096, 4096
      %47 = vsyncadd [#allocation5], %s46
      %s48 = sshll.u32 [#allocation6], 4
      %s49 = int_to_ptr.vmem [resolvable:$true] %s48
      %54 = dma.hbm_to_vmem [thread:$0]  %s3, 4096, %s49, [#allocation5], 128, 128, 8
    $region17: #{net_forward.1} parent=1 // pred_fallthru
      _
    // Predicated region
    $region18: #{net_forward.1} parent=1 // pred_check
      _
    $region19: #{net_forward.1} parent=1 // pred_check_branch
      %56 = sbr.rel (0) target = $region21
    $region20: #{net_forward.1} parent=1 // pred_region
      %s58 = ssub.s32 4096, 4096
      %59 = vsyncadd [#allocation8], %s58
      %s60 = sshll.u32 [#allocation7], 4
      %s61 = int_to_ptr.vmem [resolvable:$true] %s60
      %66 = dma.hbm_to_vmem [thread:$0]  %s4, 4096, %s61, [#allocation8], 128, 128, 8
    $region21: #{net_forward.1} parent=1 // pred_fallthru
      _
    // Predicated region
    $region22: #{net_forward.1} parent=1 // pred_check
      _
    $region23: #{net_forward.1} parent=1 // pred_check_branch
      %68 = sbr.rel (0) target = $region25
    $region24: #{net_forward.1} parent=1 // pred_region
      %s70 = ssub.s32 2048, 2048
      %71 = vsyncadd [#allocation8], %s70
      %s72 = sshll.u32 [#allocation9], 4
      %s73 = int_to_ptr.vmem [resolvable:$true] %s72
      %78 = dma.hbm_to_vmem [thread:$0]  %s5, 2048, %s73, [#allocation8], 64, 64, 4
    $region25: #{net_forward.1} parent=1 // pred_fallthru
      _
    // Predicated region
    $region26: #{net_forward.1} parent=1 // pred_check
      _
    $region27: #{net_forward.1} parent=1 // pred_check_branch
      %80 = sbr.rel (0) target = $region29
    $region28: #{net_forward.1} parent=1 // pred_region
      %s82 = ssub.s32 1024, 1024
      %83 = vsyncadd [#allocation11], %s82
      %s84 = sshll.u32 [#allocation10], 4
      %s85 = int_to_ptr.vmem [resolvable:$true] %s84
      %90 = dma.hbm_to_vmem [thread:$0]  %s6, 1024, %s85, [#allocation11], 64, 64, 4
    $region29: #{net_forward.1} parent=1 // pred_fallthru
      _
    // Predicated region
    $region30: #{net_forward.1} parent=1 // pred_check
      _
    $region31: #{net_forward.1} parent=1 // pred_check_branch
      %92 = sbr.rel (0) target = $region33
    $region32: #{net_forward.1} parent=1 // pred_region
      _
    $region33: #{net_forward.1} parent=1 // pred_fallthru
      _
    // Predicated region
    $region34: #{net_forward.1} parent=1 // pred_check
      _
    $region35: #{net_forward.1} parent=1 // pred_check_branch
      %94 = sbr.rel (0) target = $region37
    $region36: #{net_forward.1} parent=1 // pred_region
      %95 = dma.done [#allocation3], 4096
    $region37: #{net_forward.1} parent=1 // pred_fallthru
      _
    // Predicated region
    $region38: #{net_forward.1} parent=1 // pred_check
      _
    $region39: #{net_forward.1} parent=1 // pred_check_branch
      %97 = sbr.rel (0) target = $region41
    $region40: #{net_forward.1} parent=1 // pred_region
      %98 = dma.done [#allocation5], 8192
    $region41: #{net_forward.1} parent=1 // pred_fallthru
      _
    // Predicated region
    $region42: #{net_forward.1} parent=1 // pred_check
      _
    $region43: #{net_forward.1} parent=1 // pred_check_branch
      %100 = sbr.rel (0) target = $region45
    $region44: #{net_forward.1} parent=1 // pred_region
      %101 = dma.done [#allocation5], 4096
    $region45: #{net_forward.1} parent=1 // pred_fallthru
      _
    // Predicated region
    $region46: #{net_forward.1} parent=1 // pred_check
      _
    $region47: #{net_forward.1} parent=1 // pred_check_branch
      %103 = sbr.rel (0) target = $region49
    $region48: #{net_forward.1} parent=1 // pred_region
      %104 = dma.done [#allocation8], 4096
    $region49: #{net_forward.1} parent=1 // pred_fallthru
      _
    // Predicated region
    $region50: #{net_forward.1} parent=1 // pred_check
      _
    $region51: #{net_forward.1} parent=1 // pred_check_branch
      %106 = sbr.rel (0) target = $region53
    $region52: #{net_forward.1} parent=1 // pred_region
      %107 = dma.done [#allocation8], 2048
    $region53: #{net_forward.1} parent=1 // pred_fallthru
      _
    // Predicated region
    $region54: #{net_forward.1} parent=1 // pred_check
      _
    $region55: #{net_forward.1} parent=1 // pred_check_branch
      %109 = sbr.rel (0) target = $region57
    $region56: #{net_forward.1} parent=1 // pred_region
      %110 = dma.done [#allocation11], 1024
    $region57: #{net_forward.1} parent=1 // pred_fallthru
      _
    %v112 = vld [vmem:[%s0] sm:$0xf]
    %v113 = vld [vmem:[%s7] sm:$0xf]
    %v114 = vld [vmem:[#allocation2] sm:$0xff]
    %v115 = vld [vmem:[#allocation2 + $0x8] sm:$0xff]
    %v116 = vld [vmem:[#allocation2 + $0x10] sm:$0xff]
    %v117 = vld [vmem:[#allocation2 + $0x18] sm:$0xff]
    %v118 = vld [vmem:[#allocation2 + $0x20] sm:$0xff]
    %v119 = vld [vmem:[#allocation2 + $0x28] sm:$0xff]
    %v120 = vld [vmem:[#allocation2 + $0x30] sm:$0xff]
    %v121 = vld [vmem:[#allocation2 + $0x38] sm:$0xff]
    %v122 = vld [vmem:[#allocation2 + $0x40] sm:$0xff]
    %v123 = vld [vmem:[#allocation2 + $0x48] sm:$0xff]
    %v124 = vld [vmem:[#allocation2 + $0x50] sm:$0xff]
    %v125 = vld [vmem:[#allocation2 + $0x58] sm:$0xff]
    %v126 = vld [vmem:[#allocation2 + $0x60] sm:$0xff]
    %v127 = vld [vmem:[#allocation2 + $0x68] sm:$0xff]
    %v128 = vld [vmem:[#allocation2 + $0x70] sm:$0xff]
    %v129 = vld [vmem:[#allocation2 + $0x78] sm:$0xff]
    %v130 = vld [vmem:[#allocation2 + $0x80] sm:$0xff]
    %v131 = vld [vmem:[#allocation2 + $0x88] sm:$0xff]
    %v132 = vld [vmem:[#allocation2 + $0x90] sm:$0xff]
    %v133 = vld [vmem:[#allocation2 + $0x98] sm:$0xff]
    %v134 = vld [vmem:[#allocation2 + $0xa0] sm:$0xff]
    %v135 = vld [vmem:[#allocation2 + $0xa8] sm:$0xff]
    %v136 = vld [vmem:[#allocation2 + $0xb0] sm:$0xff]
    %v137 = vld [vmem:[#allocation2 + $0xb8] sm:$0xff]
    %v138 = vld [vmem:[#allocation2 + $0xc0] sm:$0xff]
    %v139 = vld [vmem:[#allocation2 + $0xc8] sm:$0xff]
    %v140 = vld [vmem:[#allocation2 + $0xd0] sm:$0xff]
    %v141 = vld [vmem:[#allocation2 + $0xd8] sm:$0xff]
    %v142 = vld [vmem:[#allocation2 + $0xe0] sm:$0xff]
    %v143 = vld [vmem:[#allocation2 + $0xe8] sm:$0xff]
    %v144 = vld [vmem:[#allocation2 + $0xf0] sm:$0xff]
    %v145 = vld [vmem:[#allocation2 + $0xf8] sm:$0xff]
    %v147 = vlaneseq
    %v148 = vshrl.u32 %v147, 7
    %v149 = vsub.s32 0, %v148
    %v150 = vrot.slane %v113, %v149
    %v151 = vlaneseq
    %v152 = vshrl.u32 %v151, 7
    %v153 = vsub.s32 1, %v152
    %v154 = vrot.slane %v113, %v153
    %v155 = vlaneseq
    %v156 = vshrl.u32 %v155, 7
    %v157 = vsub.s32 2, %v156
    %v158 = vrot.slane %v113, %v157
    %v159 = vlaneseq
    %v160 = vshrl.u32 %v159, 7
    %v161 = vsub.s32 3, %v160
    %v162 = vrot.slane %v113, %v161
    %v199 = vunpack.c.l.b16 %v114
    %v200 = vunpack.c.h.b16 %v114
    %v201 = vunpack.c.l.b16 %v115
    %v202 = vunpack.c.h.b16 %v115
    %v203 = vunpack.c.l.b16 %v116
    %v204 = vunpack.c.h.b16 %v116
    %v205 = vunpack.c.l.b16 %v117
    %v206 = vunpack.c.h.b16 %v117
    %v207 = vunpack.c.l.b16 %v118
    %v208 = vunpack.c.h.b16 %v118
    %v209 = vunpack.c.l.b16 %v119
    %v210 = vunpack.c.h.b16 %v119
    %v211 = vunpack.c.l.b16 %v120
    %v212 = vunpack.c.h.b16 %v120
    %v213 = vunpack.c.l.b16 %v121
    %v214 = vunpack.c.h.b16 %v121
    %v215 = vunpack.c.l.b16 %v122
    %v216 = vunpack.c.h.b16 %v122
    %v217 = vunpack.c.l.b16 %v123
    %v218 = vunpack.c.h.b16 %v123
    %v219 = vunpack.c.l.b16 %v124
    %v220 = vunpack.c.h.b16 %v124
    %v221 = vunpack.c.l.b16 %v125
    %v222 = vunpack.c.h.b16 %v125
    %v223 = vunpack.c.l.b16 %v126
    %v224 = vunpack.c.h.b16 %v126
    %v225 = vunpack.c.l.b16 %v127
    %v226 = vunpack.c.h.b16 %v127
    %v227 = vunpack.c.l.b16 %v128
    %v228 = vunpack.c.h.b16 %v128
    %v229 = vunpack.c.l.b16 %v129
    %v230 = vunpack.c.h.b16 %v129
    %v231 = vunpack.c.l.b16 %v130
    %v232 = vunpack.c.h.b16 %v130
    %v233 = vunpack.c.l.b16 %v131
    %v234 = vunpack.c.h.b16 %v131
    %v235 = vunpack.c.l.b16 %v132
    %v236 = vunpack.c.h.b16 %v132
    %v237 = vunpack.c.l.b16 %v133
    %v238 = vunpack.c.h.b16 %v133
    %v239 = vunpack.c.l.b16 %v134
    %v240 = vunpack.c.h.b16 %v134
    %v241 = vunpack.c.l.b16 %v135
    %v242 = vunpack.c.h.b16 %v135
    %v243 = vunpack.c.l.b16 %v136
    %v244 = vunpack.c.h.b16 %v136
    %v245 = vunpack.c.l.b16 %v137
    %v246 = vunpack.c.h.b16 %v137
    %v247 = vunpack.c.l.b16 %v138
    %v248 = vunpack.c.h.b16 %v138
    %v249 = vunpack.c.l.b16 %v139
    %v250 = vunpack.c.h.b16 %v139
    %v251 = vunpack.c.l.b16 %v140
    %v252 = vunpack.c.h.b16 %v140
    %v253 = vunpack.c.l.b16 %v141
    %v254 = vunpack.c.h.b16 %v141
    %v255 = vunpack.c.l.b16 %v142
    %v256 = vunpack.c.h.b16 %v142
    %v257 = vunpack.c.l.b16 %v143
    %v258 = vunpack.c.h.b16 %v143
    %v259 = vunpack.c.l.b16 %v144
    %v260 = vunpack.c.h.b16 %v144
    %v261 = vunpack.c.l.b16 %v145
    %v262 = vunpack.c.h.b16 %v145
    %v263 = vpack.c.b16 %v203, %v199
    %v264 = vpack.c.b16 %v204, %v200
    %v265 = vpack.c.b16 %v205, %v201
    %v266 = vpack.c.b16 %v206, %v202
    %v267 = vpack.c.b16 %v211, %v207
    %v268 = vpack.c.b16 %v212, %v208
    %v269 = vpack.c.b16 %v213, %v209
    %v270 = vpack.c.b16 %v214, %v210
    %v271 = vpack.c.b16 %v219, %v215
    %v272 = vpack.c.b16 %v220, %v216
    %v273 = vpack.c.b16 %v221, %v217
    %v274 = vpack.c.b16 %v222, %v218
    %v275 = vpack.c.b16 %v227, %v223
    %v276 = vpack.c.b16 %v228, %v224
    %v277 = vpack.c.b16 %v229, %v225
    %v278 = vpack.c.b16 %v230, %v226
    %v279 = vpack.c.b16 %v235, %v231
    %v280 = vpack.c.b16 %v236, %v232
    %v281 = vpack.c.b16 %v237, %v233
    %v282 = vpack.c.b16 %v238, %v234
    %v283 = vpack.c.b16 %v243, %v239
    %v284 = vpack.c.b16 %v244, %v240
    %v285 = vpack.c.b16 %v245, %v241
    %v286 = vpack.c.b16 %v246, %v242
    %v287 = vpack.c.b16 %v251, %v247
    %v288 = vpack.c.b16 %v252, %v248
    %v289 = vpack.c.b16 %v253, %v249
    %v290 = vpack.c.b16 %v254, %v250
    %v291 = vpack.c.b16 %v259, %v255
    %v292 = vpack.c.b16 %v260, %v256
    %v293 = vpack.c.b16 %v261, %v257
    %v294 = vpack.c.b16 %v262, %v258
    %327 = vmatprep.subr.bf16.mxu0 %v292
    %328 = vmatpush1.bf16.msra.mxu0 %v291
    %329 = vmatprep.subr.bf16.mxu0 %v288
    %330 = vmatpush1.bf16.msra.mxu0 %v287
    %331 = vmatprep.subr.bf16.mxu0 %v284
    %332 = vmatpush1.bf16.msra.mxu0 %v283
    %333 = vmatprep.subr.bf16.mxu0 %v280
    %334 = vmatpush1.bf16.msra.mxu0 %v279
    %335 = vmatprep.subr.bf16.mxu0 %v276
    %336 = vmatpush1.bf16.msra.mxu0 %v275
    %337 = vmatprep.subr.bf16.mxu0 %v272
    %338 = vmatpush1.bf16.msra.mxu0 %v271
    %339 = vmatprep.subr.bf16.mxu0 %v268
    %340 = vmatpush1.bf16.msra.mxu0 %v267
    %341 = vmatprep.subr.bf16.mxu0 %v264
    %342 = vmatpush1.bf16.msra.mxu0 %v263
    %343 = vmatprep.subr.bf16.mxu0 0
    %344 = vmatpush2.bf16.msra.mxu0 0
    %345 = vmatprep.subr.bf16.mxu0 0
    %346 = vmatpush2.bf16.msra.mxu0 0
    %347 = vmatprep.subr.bf16.mxu0 0
    %348 = vmatpush2.bf16.msra.mxu0 0
    %349 = vmatprep.subr.bf16.mxu0 0
    %350 = vmatpush2.bf16.msra.mxu0 0
    %351 = vmatprep.subr.bf16.mxu0 0
    %352 = vmatpush2.bf16.msra.mxu0 0
    %353 = vmatprep.subr.bf16.mxu0 0
    %354 = vmatpush2.bf16.msra.mxu0 0
    %355 = vmatprep.subr.bf16.mxu0 0
    %356 = vmatpush2.bf16.msra.mxu0 0
    %357 = vmatprep.subr.bf16.mxu0 0
    %358 = vmatpush2.bf16.msra.mxu0 0
    %359 = vmatprep.mubr.bf16.mxu0 0
    %360 = vmatmul.mubr.bf16.gmra.mxu0 %v112
    %v361 = vpop.f32.mrf.mxu0
    %v362 = vadd.f32 %v150, %v361
    %v363 = vpop.f32.mrf.mxu0
    %v364 = vadd.f32 %v154, %v363
    %v365 = vpop.f32.mrf.mxu0
    %v366 = vpop.f32.mrf.mxu0
    %367 = vdwg.mxu0
    %368 = vmatprep.subr.bf16.mxu0 %v294
    %369 = vmatpush1.bf16.msra.mxu0 %v293
    %370 = vmatprep.subr.bf16.mxu0 %v290
    %371 = vmatpush1.bf16.msra.mxu0 %v289
    %372 = vmatprep.subr.bf16.mxu0 %v286
    %373 = vmatpush1.bf16.msra.mxu0 %v285
    %374 = vmatprep.subr.bf16.mxu0 %v282
    %375 = vmatpush1.bf16.msra.mxu0 %v281
    %376 = vmatprep.subr.bf16.mxu0 %v278
    %377 = vmatpush1.bf16.msra.mxu0 %v277
    %378 = vmatprep.subr.bf16.mxu0 %v274
    %379 = vmatpush1.bf16.msra.mxu0 %v273
    %380 = vmatprep.subr.bf16.mxu0 %v270
    %381 = vmatpush1.bf16.msra.mxu0 %v269
    %382 = vmatprep.subr.bf16.mxu0 %v266
    %383 = vmatpush1.bf16.msra.mxu0 %v265
    %384 = vmatprep.subr.bf16.mxu0 0
    %385 = vmatpush2.bf16.msra.mxu0 0
    %386 = vmatprep.subr.bf16.mxu0 0
    %387 = vmatpush2.bf16.msra.mxu0 0
    %388 = vmatprep.subr.bf16.mxu0 0
    %389 = vmatpush2.bf16.msra.mxu0 0
    %390 = vmatprep.subr.bf16.mxu0 0
    %391 = vmatpush2.bf16.msra.mxu0 0
    %392 = vmatprep.subr.bf16.mxu0 0
    %393 = vmatpush2.bf16.msra.mxu0 0
    %394 = vmatprep.subr.bf16.mxu0 0
    %395 = vmatpush2.bf16.msra.mxu0 0
    %396 = vmatprep.subr.bf16.mxu0 0
    %397 = vmatpush2.bf16.msra.mxu0 0
    %398 = vmatprep.subr.bf16.mxu0 0
    %399 = vmatpush2.bf16.msra.mxu0 0
    %400 = vmatprep.mubr.bf16.mxu0 0
    %401 = vmatmul.mubr.bf16.gmra.mxu0 %v112
    %v402 = vpop.f32.mrf.mxu0
    %v403 = vadd.f32 %v158, %v402
    %v404 = vpop.f32.mrf.mxu0
    %v405 = vadd.f32 %v162, %v404
    %v406 = vpop.f32.mrf.mxu0
    %v407 = vpop.f32.mrf.mxu0
    %408 = vdwg.mxu0
    %v409 = vmul.f32 %v362, 0.01
    %v410 = vmul.f32 %v364, 0.01
    %v411 = vmul.f32 %v403, 0.01
    %v412 = vmul.f32 %v405, 0.01
    %v413 = vmax.f32 %v362, %v409
    %v414 = vmax.f32 %v364, %v410
    %v415 = vmax.f32 %v403, %v411
    %v416 = vmax.f32 %v405, %v412
    %v417 = vpack.c.bf16 %v413, %v413
    %v418 = vpack.c.bf16 %v414, %v414
    %v419 = vpack.c.bf16 %v415, %v415
    %v420 = vpack.c.bf16 %v416, %v416
    %v421 = vld [vmem:[%s7 + $0x4] sm:$0x3]
    %v422 = vld [vmem:[#allocation4] sm:$0xff]
    %v423 = vld [vmem:[#allocation4 + $0x8] sm:$0xff]
    %v424 = vld [vmem:[#allocation4 + $0x10] sm:$0xff]
    %v425 = vld [vmem:[#allocation4 + $0x18] sm:$0xff]
    %v426 = vld [vmem:[#allocation4 + $0x20] sm:$0xff]
    %v427 = vld [vmem:[#allocation4 + $0x28] sm:$0xff]
    %v428 = vld [vmem:[#allocation4 + $0x30] sm:$0xff]
    %v429 = vld [vmem:[#allocation4 + $0x38] sm:$0xff]
    %v430 = vld [vmem:[#allocation4 + $0x40] sm:$0xff]
    %v431 = vld [vmem:[#allocation4 + $0x48] sm:$0xff]
    %v432 = vld [vmem:[#allocation4 + $0x50] sm:$0xff]
    %v433 = vld [vmem:[#allocation4 + $0x58] sm:$0xff]
    %v434 = vld [vmem:[#allocation4 + $0x60] sm:$0xff]
    %v435 = vld [vmem:[#allocation4 + $0x68] sm:$0xff]
    %v436 = vld [vmem:[#allocation4 + $0x70] sm:$0xff]
    %v437 = vld [vmem:[#allocation4 + $0x78] sm:$0xff]
    %v438 = vld [vmem:[#allocation4 + $0x80] sm:$0xff]
    %v439 = vld [vmem:[#allocation4 + $0x88] sm:$0xff]
    %v440 = vld [vmem:[#allocation4 + $0x90] sm:$0xff]
    %v441 = vld [vmem:[#allocation4 + $0x98] sm:$0xff]
    %v442 = vld [vmem:[#allocation4 + $0xa0] sm:$0xff]
    %v443 = vld [vmem:[#allocation4 + $0xa8] sm:$0xff]
    %v444 = vld [vmem:[#allocation4 + $0xb0] sm:$0xff]
    %v445 = vld [vmem:[#allocation4 + $0xb8] sm:$0xff]
    %v446 = vld [vmem:[#allocation4 + $0xc0] sm:$0xff]
    %v447 = vld [vmem:[#allocation4 + $0xc8] sm:$0xff]
    %v448 = vld [vmem:[#allocation4 + $0xd0] sm:$0xff]
    %v449 = vld [vmem:[#allocation4 + $0xd8] sm:$0xff]
    %v450 = vld [vmem:[#allocation4 + $0xe0] sm:$0xff]
    %v451 = vld [vmem:[#allocation4 + $0xe8] sm:$0xff]
    %v452 = vld [vmem:[#allocation4 + $0xf0] sm:$0xff]
    %v453 = vld [vmem:[#allocation4 + $0xf8] sm:$0xff]
    %v454 = vld [vmem:[#allocation4 + $0x100] sm:$0xff]
    %v455 = vld [vmem:[#allocation4 + $0x108] sm:$0xff]
    %v456 = vld [vmem:[#allocation4 + $0x110] sm:$0xff]
    %v457 = vld [vmem:[#allocation4 + $0x118] sm:$0xff]
    %v458 = vld [vmem:[#allocation4 + $0x120] sm:$0xff]
    %v459 = vld [vmem:[#allocation4 + $0x128] sm:$0xff]
    %v460 = vld [vmem:[#allocation4 + $0x130] sm:$0xff]
    %v461 = vld [vmem:[#allocation4 + $0x138] sm:$0xff]
    %v462 = vld [vmem:[#allocation4 + $0x140] sm:$0xff]
    %v463 = vld [vmem:[#allocation4 + $0x148] sm:$0xff]
    %v464 = vld [vmem:[#allocation4 + $0x150] sm:$0xff]
    %v465 = vld [vmem:[#allocation4 + $0x158] sm:$0xff]
    %v466 = vld [vmem:[#allocation4 + $0x160] sm:$0xff]
    %v467 = vld [vmem:[#allocation4 + $0x168] sm:$0xff]
    %v468 = vld [vmem:[#allocation4 + $0x170] sm:$0xff]
    %v469 = vld [vmem:[#allocation4 + $0x178] sm:$0xff]
    %v470 = vld [vmem:[#allocation4 + $0x180] sm:$0xff]
    %v471 = vld [vmem:[#allocation4 + $0x188] sm:$0xff]
    %v472 = vld [vmem:[#allocation4 + $0x190] sm:$0xff]
    %v473 = vld [vmem:[#allocation4 + $0x198] sm:$0xff]
    %v474 = vld [vmem:[#allocation4 + $0x1a0] sm:$0xff]
    %v475 = vld [vmem:[#allocation4 + $0x1a8] sm:$0xff]
    %v476 = vld [vmem:[#allocation4 + $0x1b0] sm:$0xff]
    %v477 = vld [vmem:[#allocation4 + $0x1b8] sm:$0xff]
    %v478 = vld [vmem:[#allocation4 + $0x1c0] sm:$0xff]
    %v479 = vld [vmem:[#allocation4 + $0x1c8] sm:$0xff]
    %v480 = vld [vmem:[#allocation4 + $0x1d0] sm:$0xff]
    %v481 = vld [vmem:[#allocation4 + $0x1d8] sm:$0xff]
    %v482 = vld [vmem:[#allocation4 + $0x1e0] sm:$0xff]
    %v483 = vld [vmem:[#allocation4 + $0x1e8] sm:$0xff]
    %v484 = vld [vmem:[#allocation4 + $0x1f0] sm:$0xff]
    %v485 = vld [vmem:[#allocation4 + $0x1f8] sm:$0xff]
    %v487 = vlaneseq
    %v488 = vshrl.u32 %v487, 7
    %v489 = vsub.s32 0, %v488
    %v490 = vrot.slane %v421, %v489
    %v491 = vlaneseq
    %v492 = vshrl.u32 %v491, 7
    %v493 = vsub.s32 1, %v492
    %v494 = vrot.slane %v421, %v493
    %v561 = vunpack.c.l.b16 %v422
    %v562 = vunpack.c.h.b16 %v422
    %v563 = vunpack.c.l.b16 %v423
    %v564 = vunpack.c.h.b16 %v423
    %v565 = vunpack.c.l.b16 %v424
    %v566 = vunpack.c.h.b16 %v424
    %v567 = vunpack.c.l.b16 %v425
    %v568 = vunpack.c.h.b16 %v425
    %v569 = vunpack.c.l.b16 %v426
    %v570 = vunpack.c.h.b16 %v426
    %v571 = vunpack.c.l.b16 %v427
    %v572 = vunpack.c.h.b16 %v427
    %v573 = vunpack.c.l.b16 %v428
    %v574 = vunpack.c.h.b16 %v428
    %v575 = vunpack.c.l.b16 %v429
    %v576 = vunpack.c.h.b16 %v429
    %v577 = vunpack.c.l.b16 %v430
    %v578 = vunpack.c.h.b16 %v430
    %v579 = vunpack.c.l.b16 %v431
    %v580 = vunpack.c.h.b16 %v431
    %v581 = vunpack.c.l.b16 %v432
    %v582 = vunpack.c.h.b16 %v432
    %v583 = vunpack.c.l.b16 %v433
    %v584 = vunpack.c.h.b16 %v433
    %v585 = vunpack.c.l.b16 %v434
    %v586 = vunpack.c.h.b16 %v434
    %v587 = vunpack.c.l.b16 %v435
    %v588 = vunpack.c.h.b16 %v435
    %v589 = vunpack.c.l.b16 %v436
    %v590 = vunpack.c.h.b16 %v436
    %v591 = vunpack.c.l.b16 %v437
    %v592 = vunpack.c.h.b16 %v437
    %v593 = vunpack.c.l.b16 %v438
    %v594 = vunpack.c.h.b16 %v438
    %v595 = vunpack.c.l.b16 %v439
    %v596 = vunpack.c.h.b16 %v439
    %v597 = vunpack.c.l.b16 %v440
    %v598 = vunpack.c.h.b16 %v440
    %v599 = vunpack.c.l.b16 %v441
    %v600 = vunpack.c.h.b16 %v441
    %v601 = vunpack.c.l.b16 %v442
    %v602 = vunpack.c.h.b16 %v442
    %v603 = vunpack.c.l.b16 %v443
    %v604 = vunpack.c.h.b16 %v443
    %v605 = vunpack.c.l.b16 %v444
    %v606 = vunpack.c.h.b16 %v444
    %v607 = vunpack.c.l.b16 %v445
    %v608 = vunpack.c.h.b16 %v445
    %v609 = vunpack.c.l.b16 %v446
    %v610 = vunpack.c.h.b16 %v446
    %v611 = vunpack.c.l.b16 %v447
    %v612 = vunpack.c.h.b16 %v447
    %v613 = vunpack.c.l.b16 %v448
    %v614 = vunpack.c.h.b16 %v448
    %v615 = vunpack.c.l.b16 %v449
    %v616 = vunpack.c.h.b16 %v449
    %v617 = vunpack.c.l.b16 %v450
    %v618 = vunpack.c.h.b16 %v450
    %v619 = vunpack.c.l.b16 %v451
    %v620 = vunpack.c.h.b16 %v451
    %v621 = vunpack.c.l.b16 %v452
    %v622 = vunpack.c.h.b16 %v452
    %v623 = vunpack.c.l.b16 %v453
    %v624 = vunpack.c.h.b16 %v453
    %v625 = vunpack.c.l.b16 %v454
    %v626 = vunpack.c.h.b16 %v454
    %v627 = vunpack.c.l.b16 %v455
    %v628 = vunpack.c.h.b16 %v455
    %v629 = vunpack.c.l.b16 %v456
    %v630 = vunpack.c.h.b16 %v456
    %v631 = vunpack.c.l.b16 %v457
    %v632 = vunpack.c.h.b16 %v457
    %v633 = vunpack.c.l.b16 %v458
    %v634 = vunpack.c.h.b16 %v458
    %v635 = vunpack.c.l.b16 %v459
    %v636 = vunpack.c.h.b16 %v459
    %v637 = vunpack.c.l.b16 %v460
    %v638 = vunpack.c.h.b16 %v460
    %v639 = vunpack.c.l.b16 %v461
    %v640 = vunpack.c.h.b16 %v461
    %v641 = vunpack.c.l.b16 %v462
    %v642 = vunpack.c.h.b16 %v462
    %v643 = vunpack.c.l.b16 %v463
    %v644 = vunpack.c.h.b16 %v463
    %v645 = vunpack.c.l.b16 %v464
    %v646 = vunpack.c.h.b16 %v464
    %v647 = vunpack.c.l.b16 %v465
    %v648 = vunpack.c.h.b16 %v465
    %v649 = vunpack.c.l.b16 %v466
    %v650 = vunpack.c.h.b16 %v466
    %v651 = vunpack.c.l.b16 %v467
    %v652 = vunpack.c.h.b16 %v467
    %v653 = vunpack.c.l.b16 %v468
    %v654 = vunpack.c.h.b16 %v468
    %v655 = vunpack.c.l.b16 %v469
    %v656 = vunpack.c.h.b16 %v469
    %v657 = vunpack.c.l.b16 %v470
    %v658 = vunpack.c.h.b16 %v470
    %v659 = vunpack.c.l.b16 %v471
    %v660 = vunpack.c.h.b16 %v471
    %v661 = vunpack.c.l.b16 %v472
    %v662 = vunpack.c.h.b16 %v472
    %v663 = vunpack.c.l.b16 %v473
    %v664 = vunpack.c.h.b16 %v473
    %v665 = vunpack.c.l.b16 %v474
    %v666 = vunpack.c.h.b16 %v474
    %v667 = vunpack.c.l.b16 %v475
    %v668 = vunpack.c.h.b16 %v475
    %v669 = vunpack.c.l.b16 %v476
    %v670 = vunpack.c.h.b16 %v476
    %v671 = vunpack.c.l.b16 %v477
    %v672 = vunpack.c.h.b16 %v477
    %v673 = vunpack.c.l.b16 %v478
    %v674 = vunpack.c.h.b16 %v478
    %v675 = vunpack.c.l.b16 %v479
    %v676 = vunpack.c.h.b16 %v479
    %v677 = vunpack.c.l.b16 %v480
    %v678 = vunpack.c.h.b16 %v480
    %v679 = vunpack.c.l.b16 %v481
    %v680 = vunpack.c.h.b16 %v481
    %v681 = vunpack.c.l.b16 %v482
    %v682 = vunpack.c.h.b16 %v482
    %v683 = vunpack.c.l.b16 %v483
    %v684 = vunpack.c.h.b16 %v483
    %v685 = vunpack.c.l.b16 %v484
    %v686 = vunpack.c.h.b16 %v484
    %v687 = vunpack.c.l.b16 %v485
    %v688 = vunpack.c.h.b16 %v485
    %v689 = vpack.c.b16 %v563, %v561
    %v690 = vpack.c.b16 %v564, %v562
    %v691 = vpack.c.b16 %v567, %v565
    %v692 = vpack.c.b16 %v568, %v566
    %v693 = vpack.c.b16 %v571, %v569
    %v694 = vpack.c.b16 %v572, %v570
    %v695 = vpack.c.b16 %v575, %v573
    %v696 = vpack.c.b16 %v576, %v574
    %v697 = vpack.c.b16 %v579, %v577
    %v698 = vpack.c.b16 %v580, %v578
    %v699 = vpack.c.b16 %v583, %v581
    %v700 = vpack.c.b16 %v584, %v582
    %v701 = vpack.c.b16 %v587, %v585
    %v702 = vpack.c.b16 %v588, %v586
    %v703 = vpack.c.b16 %v591, %v589
    %v704 = vpack.c.b16 %v592, %v590
    %v705 = vpack.c.b16 %v595, %v593
    %v706 = vpack.c.b16 %v596, %v594
    %v707 = vpack.c.b16 %v599, %v597
    %v708 = vpack.c.b16 %v600, %v598
    %v709 = vpack.c.b16 %v603, %v601
    %v710 = vpack.c.b16 %v604, %v602
    %v711 = vpack.c.b16 %v607, %v605
    %v712 = vpack.c.b16 %v608, %v606
    %v713 = vpack.c.b16 %v611, %v609
    %v714 = vpack.c.b16 %v612, %v610
    %v715 = vpack.c.b16 %v615, %v613
    %v716 = vpack.c.b16 %v616, %v614
    %v717 = vpack.c.b16 %v619, %v617
    %v718 = vpack.c.b16 %v620, %v618
    %v719 = vpack.c.b16 %v623, %v621
    %v720 = vpack.c.b16 %v624, %v622
    %v721 = vpack.c.b16 %v627, %v625
    %v722 = vpack.c.b16 %v628, %v626
    %v723 = vpack.c.b16 %v631, %v629
    %v724 = vpack.c.b16 %v632, %v630
    %v725 = vpack.c.b16 %v635, %v633
    %v726 = vpack.c.b16 %v636, %v634
    %v727 = vpack.c.b16 %v639, %v637
    %v728 = vpack.c.b16 %v640, %v638
    %v729 = vpack.c.b16 %v643, %v641
    %v730 = vpack.c.b16 %v644, %v642
    %v731 = vpack.c.b16 %v647, %v645
    %v732 = vpack.c.b16 %v648, %v646
    %v733 = vpack.c.b16 %v651, %v649
    %v734 = vpack.c.b16 %v652, %v650
    %v735 = vpack.c.b16 %v655, %v653
    %v736 = vpack.c.b16 %v656, %v654
    %v737 = vpack.c.b16 %v659, %v657
    %v738 = vpack.c.b16 %v660, %v658
    %v739 = vpack.c.b16 %v663, %v661
    %v740 = vpack.c.b16 %v664, %v662
    %v741 = vpack.c.b16 %v667, %v665
    %v742 = vpack.c.b16 %v668, %v666
    %v743 = vpack.c.b16 %v671, %v669
    %v744 = vpack.c.b16 %v672, %v670
    %v745 = vpack.c.b16 %v675, %v673
    %v746 = vpack.c.b16 %v676, %v674
    %v747 = vpack.c.b16 %v679, %v677
    %v748 = vpack.c.b16 %v680, %v678
    %v749 = vpack.c.b16 %v683, %v681
    %v750 = vpack.c.b16 %v684, %v682
    %v751 = vpack.c.b16 %v687, %v685
    %v752 = vpack.c.b16 %v688, %v686
    %817 = vmatprep.subr.bf16.mxu0 %v704
    %818 = vmatpush1.bf16.msra.mxu0 %v703
    %819 = vmatprep.subr.bf16.mxu0 %v702
    %820 = vmatpush1.bf16.msra.mxu0 %v701
    %821 = vmatprep.subr.bf16.mxu0 %v700
    %822 = vmatpush1.bf16.msra.mxu0 %v699
    %823 = vmatprep.subr.bf16.mxu0 %v698
    %824 = vmatpush1.bf16.msra.mxu0 %v697
    %825 = vmatprep.subr.bf16.mxu0 %v696
    %826 = vmatpush1.bf16.msra.mxu0 %v695
    %827 = vmatprep.subr.bf16.mxu0 %v694
    %828 = vmatpush1.bf16.msra.mxu0 %v693
    %829 = vmatprep.subr.bf16.mxu0 %v692
    %830 = vmatpush1.bf16.msra.mxu0 %v691
    %831 = vmatprep.subr.bf16.mxu0 %v690
    %832 = vmatpush1.bf16.msra.mxu0 %v689
    %833 = vmatprep.subr.bf16.mxu0 %v720
    %834 = vmatpush2.bf16.msra.mxu0 %v719
    %835 = vmatprep.subr.bf16.mxu0 %v718
    %836 = vmatpush2.bf16.msra.mxu0 %v717
    %837 = vmatprep.subr.bf16.mxu0 %v716
    %838 = vmatpush2.bf16.msra.mxu0 %v715
    %839 = vmatprep.subr.bf16.mxu0 %v714
    %840 = vmatpush2.bf16.msra.mxu0 %v713
    %841 = vmatprep.subr.bf16.mxu0 %v712
    %842 = vmatpush2.bf16.msra.mxu0 %v711
    %843 = vmatprep.subr.bf16.mxu0 %v710
    %844 = vmatpush2.bf16.msra.mxu0 %v709
    %845 = vmatprep.subr.bf16.mxu0 %v708
    %846 = vmatpush2.bf16.msra.mxu0 %v707
    %847 = vmatprep.subr.bf16.mxu0 %v706
    %848 = vmatpush2.bf16.msra.mxu0 %v705
    %849 = vmatprep.mubr.bf16.mxu0 %v418
    %850 = vmatmul.mubr.bf16.gmra.mxu0 %v417
    %v851 = vpop.f32.mrf.mxu0
    %v852 = vadd.f32 %v490, %v851
    %v853 = vpop.f32.mrf.mxu0
    %v854 = vadd.f32 %v494, %v853
    %v855 = vpop.f32.mrf.mxu0
    %v856 = vpop.f32.mrf.mxu0
    %857 = vdwg.mxu0
    %858 = vmatprep.subr.bf16.mxu0 %v736
    %859 = vmatpush1.bf16.msra.mxu0 %v735
    %860 = vmatprep.subr.bf16.mxu0 %v734
    %861 = vmatpush1.bf16.msra.mxu0 %v733
    %862 = vmatprep.subr.bf16.mxu0 %v732
    %863 = vmatpush1.bf16.msra.mxu0 %v731
    %864 = vmatprep.subr.bf16.mxu0 %v730
    %865 = vmatpush1.bf16.msra.mxu0 %v729
    %866 = vmatprep.subr.bf16.mxu0 %v728
    %867 = vmatpush1.bf16.msra.mxu0 %v727
    %868 = vmatprep.subr.bf16.mxu0 %v726
    %869 = vmatpush1.bf16.msra.mxu0 %v725
    %870 = vmatprep.subr.bf16.mxu0 %v724
    %871 = vmatpush1.bf16.msra.mxu0 %v723
    %872 = vmatprep.subr.bf16.mxu0 %v722
    %873 = vmatpush1.bf16.msra.mxu0 %v721
    %874 = vmatprep.subr.bf16.mxu0 %v752
    %875 = vmatpush2.bf16.msra.mxu0 %v751
    %876 = vmatprep.subr.bf16.mxu0 %v750
    %877 = vmatpush2.bf16.msra.mxu0 %v749
    %878 = vmatprep.subr.bf16.mxu0 %v748
    %879 = vmatpush2.bf16.msra.mxu0 %v747
    %880 = vmatprep.subr.bf16.mxu0 %v746
    %881 = vmatpush2.bf16.msra.mxu0 %v745
    %882 = vmatprep.subr.bf16.mxu0 %v744
    %883 = vmatpush2.bf16.msra.mxu0 %v743
    %884 = vmatprep.subr.bf16.mxu0 %v742
    %885 = vmatpush2.bf16.msra.mxu0 %v741
    %886 = vmatprep.subr.bf16.mxu0 %v740
    %887 = vmatpush2.bf16.msra.mxu0 %v739
    %888 = vmatprep.subr.bf16.mxu0 %v738
    %889 = vmatpush2.bf16.msra.mxu0 %v737
    %890 = vmatprep.mubr.bf16.mxu0 %v420
    %891 = vmatmul.mubr.bf16.gmra.mxu0 %v419
    %v892 = vpop.f32.mrf.mxu0
    %v893 = vadd.f32 %v852, %v892
    %v894 = vpop.f32.mrf.mxu0
    %v895 = vadd.f32 %v854, %v894
    %v896 = vpop.f32.mrf.mxu0
    %v897 = vpop.f32.mrf.mxu0
    %898 = vdwg.mxu0
    %v899 = vmul.f32 %v893, 0.01
    %v900 = vmul.f32 %v895, 0.01
    %v901 = vmax.f32 %v893, %v899
    %v902 = vmax.f32 %v895, %v900
    %v903 = vpack.c.bf16 %v901, %v901
    %v904 = vpack.c.bf16 %v902, %v902
    %v905 = vld [vmem:[%s7 + $0x6] sm:$0x3]
    %v906 = vld [vmem:[#allocation6] sm:$0xff]
    %v907 = vld [vmem:[#allocation6 + $0x8] sm:$0xff]
    %v908 = vld [vmem:[#allocation6 + $0x10] sm:$0xff]
    %v909 = vld [vmem:[#allocation6 + $0x18] sm:$0xff]
    %v910 = vld [vmem:[#allocation6 + $0x20] sm:$0xff]
    %v911 = vld [vmem:[#allocation6 + $0x28] sm:$0xff]
    %v912 = vld [vmem:[#allocation6 + $0x30] sm:$0xff]
    %v913 = vld [vmem:[#allocation6 + $0x38] sm:$0xff]
    %v914 = vld [vmem:[#allocation6 + $0x40] sm:$0xff]
    %v915 = vld [vmem:[#allocation6 + $0x48] sm:$0xff]
    %v916 = vld [vmem:[#allocation6 + $0x50] sm:$0xff]
    %v917 = vld [vmem:[#allocation6 + $0x58] sm:$0xff]
    %v918 = vld [vmem:[#allocation6 + $0x60] sm:$0xff]
    %v919 = vld [vmem:[#allocation6 + $0x68] sm:$0xff]
    %v920 = vld [vmem:[#allocation6 + $0x70] sm:$0xff]
    %v921 = vld [vmem:[#allocation6 + $0x78] sm:$0xff]
    %v922 = vld [vmem:[#allocation6 + $0x80] sm:$0xff]
    %v923 = vld [vmem:[#allocation6 + $0x88] sm:$0xff]
    %v924 = vld [vmem:[#allocation6 + $0x90] sm:$0xff]
    %v925 = vld [vmem:[#allocation6 + $0x98] sm:$0xff]
    %v926 = vld [vmem:[#allocation6 + $0xa0] sm:$0xff]
    %v927 = vld [vmem:[#allocation6 + $0xa8] sm:$0xff]
    %v928 = vld [vmem:[#allocation6 + $0xb0] sm:$0xff]
    %v929 = vld [vmem:[#allocation6 + $0xb8] sm:$0xff]
    %v930 = vld [vmem:[#allocation6 + $0xc0] sm:$0xff]
    %v931 = vld [vmem:[#allocation6 + $0xc8] sm:$0xff]
    %v932 = vld [vmem:[#allocation6 + $0xd0] sm:$0xff]
    %v933 = vld [vmem:[#allocation6 + $0xd8] sm:$0xff]
    %v934 = vld [vmem:[#allocation6 + $0xe0] sm:$0xff]
    %v935 = vld [vmem:[#allocation6 + $0xe8] sm:$0xff]
    %v936 = vld [vmem:[#allocation6 + $0xf0] sm:$0xff]
    %v937 = vld [vmem:[#allocation6 + $0xf8] sm:$0xff]
    %v939 = vlaneseq
    %v940 = vshrl.u32 %v939, 7
    %v941 = vsub.s32 0, %v940
    %v942 = vrot.slane %v905, %v941
    %v943 = vlaneseq
    %v944 = vshrl.u32 %v943, 7
    %v945 = vsub.s32 1, %v944
    %v946 = vrot.slane %v905, %v945
    %v981 = vunpack.c.l.b16 %v906
    %v982 = vunpack.c.h.b16 %v906
    %v983 = vunpack.c.l.b16 %v907
    %v984 = vunpack.c.h.b16 %v907
    %v985 = vunpack.c.l.b16 %v908
    %v986 = vunpack.c.h.b16 %v908
    %v987 = vunpack.c.l.b16 %v909
    %v988 = vunpack.c.h.b16 %v909
    %v989 = vunpack.c.l.b16 %v910
    %v990 = vunpack.c.h.b16 %v910
    %v991 = vunpack.c.l.b16 %v911
    %v992 = vunpack.c.h.b16 %v911
    %v993 = vunpack.c.l.b16 %v912
    %v994 = vunpack.c.h.b16 %v912
    %v995 = vunpack.c.l.b16 %v913
    %v996 = vunpack.c.h.b16 %v913
    %v997 = vunpack.c.l.b16 %v914
    %v998 = vunpack.c.h.b16 %v914
    %v999 = vunpack.c.l.b16 %v915
    %v1000 = vunpack.c.h.b16 %v915
    %v1001 = vunpack.c.l.b16 %v916
    %v1002 = vunpack.c.h.b16 %v916
    %v1003 = vunpack.c.l.b16 %v917
    %v1004 = vunpack.c.h.b16 %v917
    %v1005 = vunpack.c.l.b16 %v918
    %v1006 = vunpack.c.h.b16 %v918
    %v1007 = vunpack.c.l.b16 %v919
    %v1008 = vunpack.c.h.b16 %v919
    %v1009 = vunpack.c.l.b16 %v920
    %v1010 = vunpack.c.h.b16 %v920
    %v1011 = vunpack.c.l.b16 %v921
    %v1012 = vunpack.c.h.b16 %v921
    %v1013 = vunpack.c.l.b16 %v922
    %v1014 = vunpack.c.h.b16 %v922
    %v1015 = vunpack.c.l.b16 %v923
    %v1016 = vunpack.c.h.b16 %v923
    %v1017 = vunpack.c.l.b16 %v924
    %v1018 = vunpack.c.h.b16 %v924
    %v1019 = vunpack.c.l.b16 %v925
    %v1020 = vunpack.c.h.b16 %v925
    %v1021 = vunpack.c.l.b16 %v926
    %v1022 = vunpack.c.h.b16 %v926
    %v1023 = vunpack.c.l.b16 %v927
    %v1024 = vunpack.c.h.b16 %v927
    %v1025 = vunpack.c.l.b16 %v928
    %v1026 = vunpack.c.h.b16 %v928
    %v1027 = vunpack.c.l.b16 %v929
    %v1028 = vunpack.c.h.b16 %v929
    %v1029 = vunpack.c.l.b16 %v930
    %v1030 = vunpack.c.h.b16 %v930
    %v1031 = vunpack.c.l.b16 %v931
    %v1032 = vunpack.c.h.b16 %v931
    %v1033 = vunpack.c.l.b16 %v932
    %v1034 = vunpack.c.h.b16 %v932
    %v1035 = vunpack.c.l.b16 %v933
    %v1036 = vunpack.c.h.b16 %v933
    %v1037 = vunpack.c.l.b16 %v934
    %v1038 = vunpack.c.h.b16 %v934
    %v1039 = vunpack.c.l.b16 %v935
    %v1040 = vunpack.c.h.b16 %v935
    %v1041 = vunpack.c.l.b16 %v936
    %v1042 = vunpack.c.h.b16 %v936
    %v1043 = vunpack.c.l.b16 %v937
    %v1044 = vunpack.c.h.b16 %v937
    %v1045 = vpack.c.b16 %v983, %v981
    %v1046 = vpack.c.b16 %v984, %v982
    %v1047 = vpack.c.b16 %v987, %v985
    %v1048 = vpack.c.b16 %v988, %v986
    %v1049 = vpack.c.b16 %v991, %v989
    %v1050 = vpack.c.b16 %v992, %v990
    %v1051 = vpack.c.b16 %v995, %v993
    %v1052 = vpack.c.b16 %v996, %v994
    %v1053 = vpack.c.b16 %v999, %v997
    %v1054 = vpack.c.b16 %v1000, %v998
    %v1055 = vpack.c.b16 %v1003, %v1001
    %v1056 = vpack.c.b16 %v1004, %v1002
    %v1057 = vpack.c.b16 %v1007, %v1005
    %v1058 = vpack.c.b16 %v1008, %v1006
    %v1059 = vpack.c.b16 %v1011, %v1009
    %v1060 = vpack.c.b16 %v1012, %v1010
    %v1061 = vpack.c.b16 %v1015, %v1013
    %v1062 = vpack.c.b16 %v1016, %v1014
    %v1063 = vpack.c.b16 %v1019, %v1017
    %v1064 = vpack.c.b16 %v1020, %v1018
    %v1065 = vpack.c.b16 %v1023, %v1021
    %v1066 = vpack.c.b16 %v1024, %v1022
    %v1067 = vpack.c.b16 %v1027, %v1025
    %v1068 = vpack.c.b16 %v1028, %v1026
    %v1069 = vpack.c.b16 %v1031, %v1029
    %v1070 = vpack.c.b16 %v1032, %v1030
    %v1071 = vpack.c.b16 %v1035, %v1033
    %v1072 = vpack.c.b16 %v1036, %v1034
    %v1073 = vpack.c.b16 %v1039, %v1037
    %v1074 = vpack.c.b16 %v1040, %v1038
    %v1075 = vpack.c.b16 %v1043, %v1041
    %v1076 = vpack.c.b16 %v1044, %v1042
    %1109 = vmatprep.subr.bf16.mxu0 %v1060
    %1110 = vmatpush1.bf16.msra.mxu0 %v1059
    %1111 = vmatprep.subr.bf16.mxu0 %v1058
    %1112 = vmatpush1.bf16.msra.mxu0 %v1057
    %1113 = vmatprep.subr.bf16.mxu0 %v1056
    %1114 = vmatpush1.bf16.msra.mxu0 %v1055
    %1115 = vmatprep.subr.bf16.mxu0 %v1054
    %1116 = vmatpush1.bf16.msra.mxu0 %v1053
    %1117 = vmatprep.subr.bf16.mxu0 %v1052
    %1118 = vmatpush1.bf16.msra.mxu0 %v1051
    %1119 = vmatprep.subr.bf16.mxu0 %v1050
    %1120 = vmatpush1.bf16.msra.mxu0 %v1049
    %1121 = vmatprep.subr.bf16.mxu0 %v1048
    %1122 = vmatpush1.bf16.msra.mxu0 %v1047
    %1123 = vmatprep.subr.bf16.mxu0 %v1046
    %1124 = vmatpush1.bf16.msra.mxu0 %v1045
    %1125 = vmatprep.subr.bf16.mxu0 %v1076
    %1126 = vmatpush2.bf16.msra.mxu0 %v1075
    %1127 = vmatprep.subr.bf16.mxu0 %v1074
    %1128 = vmatpush2.bf16.msra.mxu0 %v1073
    %1129 = vmatprep.subr.bf16.mxu0 %v1072
    %1130 = vmatpush2.bf16.msra.mxu0 %v1071
    %1131 = vmatprep.subr.bf16.mxu0 %v1070
    %1132 = vmatpush2.bf16.msra.mxu0 %v1069
    %1133 = vmatprep.subr.bf16.mxu0 %v1068
    %1134 = vmatpush2.bf16.msra.mxu0 %v1067
    %1135 = vmatprep.subr.bf16.mxu0 %v1066
    %1136 = vmatpush2.bf16.msra.mxu0 %v1065
    %1137 = vmatprep.subr.bf16.mxu0 %v1064
    %1138 = vmatpush2.bf16.msra.mxu0 %v1063
    %1139 = vmatprep.subr.bf16.mxu0 %v1062
    %1140 = vmatpush2.bf16.msra.mxu0 %v1061
    %1141 = vmatprep.mubr.bf16.mxu0 %v904
    %1142 = vmatmul.mubr.bf16.gmra.mxu0 %v903
    %v1143 = vpop.f32.mrf.mxu0
    %v1144 = vadd.f32 %v942, %v1143
    %v1145 = vpop.f32.mrf.mxu0
    %v1146 = vadd.f32 %v946, %v1145
    %v1147 = vpop.f32.mrf.mxu0
    %v1148 = vpop.f32.mrf.mxu0
    %1149 = vdwg.mxu0
    %v1150 = vmul.f32 %v1144, 0.01
    %v1151 = vmul.f32 %v1146, 0.01
    %v1152 = vmax.f32 %v1144, %v1150
    %v1153 = vmax.f32 %v1146, %v1151
    %v1154 = vpack.c.bf16 %v1152, %v1152
    %v1155 = vpack.c.bf16 %v1153, %v1153
    %v1156 = vld [vmem:[%s7 + $0x8] sm:$0x3]
    %v1157 = vld [vmem:[#allocation7] sm:$0xff]
    %v1158 = vld [vmem:[#allocation7 + $0x8] sm:$0xff]
    %v1159 = vld [vmem:[#allocation7 + $0x10] sm:$0xff]
    %v1160 = vld [vmem:[#allocation7 + $0x18] sm:$0xff]
    %v1161 = vld [vmem:[#allocation7 + $0x20] sm:$0xff]
    %v1162 = vld [vmem:[#allocation7 + $0x28] sm:$0xff]
    %v1163 = vld [vmem:[#allocation7 + $0x30] sm:$0xff]
    %v1164 = vld [vmem:[#allocation7 + $0x38] sm:$0xff]
    %v1165 = vld [vmem:[#allocation7 + $0x40] sm:$0xff]
    %v1166 = vld [vmem:[#allocation7 + $0x48] sm:$0xff]
    %v1167 = vld [vmem:[#allocation7 + $0x50] sm:$0xff]
    %v1168 = vld [vmem:[#allocation7 + $0x58] sm:$0xff]
    %v1169 = vld [vmem:[#allocation7 + $0x60] sm:$0xff]
    %v1170 = vld [vmem:[#allocation7 + $0x68] sm:$0xff]
    %v1171 = vld [vmem:[#allocation7 + $0x70] sm:$0xff]
    %v1172 = vld [vmem:[#allocation7 + $0x78] sm:$0xff]
    %v1173 = vld [vmem:[#allocation7 + $0x80] sm:$0xff]
    %v1174 = vld [vmem:[#allocation7 + $0x88] sm:$0xff]
    %v1175 = vld [vmem:[#allocation7 + $0x90] sm:$0xff]
    %v1176 = vld [vmem:[#allocation7 + $0x98] sm:$0xff]
    %v1177 = vld [vmem:[#allocation7 + $0xa0] sm:$0xff]
    %v1178 = vld [vmem:[#allocation7 + $0xa8] sm:$0xff]
    %v1179 = vld [vmem:[#allocation7 + $0xb0] sm:$0xff]
    %v1180 = vld [vmem:[#allocation7 + $0xb8] sm:$0xff]
    %v1181 = vld [vmem:[#allocation7 + $0xc0] sm:$0xff]
    %v1182 = vld [vmem:[#allocation7 + $0xc8] sm:$0xff]
    %v1183 = vld [vmem:[#allocation7 + $0xd0] sm:$0xff]
    %v1184 = vld [vmem:[#allocation7 + $0xd8] sm:$0xff]
    %v1185 = vld [vmem:[#allocation7 + $0xe0] sm:$0xff]
    %v1186 = vld [vmem:[#allocation7 + $0xe8] sm:$0xff]
    %v1187 = vld [vmem:[#allocation7 + $0xf0] sm:$0xff]
    %v1188 = vld [vmem:[#allocation7 + $0xf8] sm:$0xff]
    %v1190 = vlaneseq
    %v1191 = vshrl.u32 %v1190, 7
    %v1192 = vsub.s32 0, %v1191
    %v1193 = vrot.slane %v1156, %v1192
    %v1194 = vlaneseq
    %v1195 = vshrl.u32 %v1194, 7
    %v1196 = vsub.s32 1, %v1195
    %v1197 = vrot.slane %v1156, %v1196
    %v1232 = vunpack.c.l.b16 %v1157
    %v1233 = vunpack.c.h.b16 %v1157
    %v1234 = vunpack.c.l.b16 %v1158
    %v1235 = vunpack.c.h.b16 %v1158
    %v1236 = vunpack.c.l.b16 %v1159
    %v1237 = vunpack.c.h.b16 %v1159
    %v1238 = vunpack.c.l.b16 %v1160
    %v1239 = vunpack.c.h.b16 %v1160
    %v1240 = vunpack.c.l.b16 %v1161
    %v1241 = vunpack.c.h.b16 %v1161
    %v1242 = vunpack.c.l.b16 %v1162
    %v1243 = vunpack.c.h.b16 %v1162
    %v1244 = vunpack.c.l.b16 %v1163
    %v1245 = vunpack.c.h.b16 %v1163
    %v1246 = vunpack.c.l.b16 %v1164
    %v1247 = vunpack.c.h.b16 %v1164
    %v1248 = vunpack.c.l.b16 %v1165
    %v1249 = vunpack.c.h.b16 %v1165
    %v1250 = vunpack.c.l.b16 %v1166
    %v1251 = vunpack.c.h.b16 %v1166
    %v1252 = vunpack.c.l.b16 %v1167
    %v1253 = vunpack.c.h.b16 %v1167
    %v1254 = vunpack.c.l.b16 %v1168
    %v1255 = vunpack.c.h.b16 %v1168
    %v1256 = vunpack.c.l.b16 %v1169
    %v1257 = vunpack.c.h.b16 %v1169
    %v1258 = vunpack.c.l.b16 %v1170
    %v1259 = vunpack.c.h.b16 %v1170
    %v1260 = vunpack.c.l.b16 %v1171
    %v1261 = vunpack.c.h.b16 %v1171
    %v1262 = vunpack.c.l.b16 %v1172
    %v1263 = vunpack.c.h.b16 %v1172
    %v1264 = vunpack.c.l.b16 %v1173
    %v1265 = vunpack.c.h.b16 %v1173
    %v1266 = vunpack.c.l.b16 %v1174
    %v1267 = vunpack.c.h.b16 %v1174
    %v1268 = vunpack.c.l.b16 %v1175
    %v1269 = vunpack.c.h.b16 %v1175
    %v1270 = vunpack.c.l.b16 %v1176
    %v1271 = vunpack.c.h.b16 %v1176
    %v1272 = vunpack.c.l.b16 %v1177
    %v1273 = vunpack.c.h.b16 %v1177
    %v1274 = vunpack.c.l.b16 %v1178
    %v1275 = vunpack.c.h.b16 %v1178
    %v1276 = vunpack.c.l.b16 %v1179
    %v1277 = vunpack.c.h.b16 %v1179
    %v1278 = vunpack.c.l.b16 %v1180
    %v1279 = vunpack.c.h.b16 %v1180
    %v1280 = vunpack.c.l.b16 %v1181
    %v1281 = vunpack.c.h.b16 %v1181
    %v1282 = vunpack.c.l.b16 %v1182
    %v1283 = vunpack.c.h.b16 %v1182
    %v1284 = vunpack.c.l.b16 %v1183
    %v1285 = vunpack.c.h.b16 %v1183
    %v1286 = vunpack.c.l.b16 %v1184
    %v1287 = vunpack.c.h.b16 %v1184
    %v1288 = vunpack.c.l.b16 %v1185
    %v1289 = vunpack.c.h.b16 %v1185
    %v1290 = vunpack.c.l.b16 %v1186
    %v1291 = vunpack.c.h.b16 %v1186
    %v1292 = vunpack.c.l.b16 %v1187
    %v1293 = vunpack.c.h.b16 %v1187
    %v1294 = vunpack.c.l.b16 %v1188
    %v1295 = vunpack.c.h.b16 %v1188
    %v1296 = vpack.c.b16 %v1234, %v1232
    %v1297 = vpack.c.b16 %v1235, %v1233
    %v1298 = vpack.c.b16 %v1238, %v1236
    %v1299 = vpack.c.b16 %v1239, %v1237
    %v1300 = vpack.c.b16 %v1242, %v1240
    %v1301 = vpack.c.b16 %v1243, %v1241
    %v1302 = vpack.c.b16 %v1246, %v1244
    %v1303 = vpack.c.b16 %v1247, %v1245
    %v1304 = vpack.c.b16 %v1250, %v1248
    %v1305 = vpack.c.b16 %v1251, %v1249
    %v1306 = vpack.c.b16 %v1254, %v1252
    %v1307 = vpack.c.b16 %v1255, %v1253
    %v1308 = vpack.c.b16 %v1258, %v1256
    %v1309 = vpack.c.b16 %v1259, %v1257
    %v1310 = vpack.c.b16 %v1262, %v1260
    %v1311 = vpack.c.b16 %v1263, %v1261
    %v1312 = vpack.c.b16 %v1266, %v1264
    %v1313 = vpack.c.b16 %v1267, %v1265
    %v1314 = vpack.c.b16 %v1270, %v1268
    %v1315 = vpack.c.b16 %v1271, %v1269
    %v1316 = vpack.c.b16 %v1274, %v1272
    %v1317 = vpack.c.b16 %v1275, %v1273
    %v1318 = vpack.c.b16 %v1278, %v1276
    %v1319 = vpack.c.b16 %v1279, %v1277
    %v1320 = vpack.c.b16 %v1282, %v1280
    %v1321 = vpack.c.b16 %v1283, %v1281
    %v1322 = vpack.c.b16 %v1286, %v1284
    %v1323 = vpack.c.b16 %v1287, %v1285
    %v1324 = vpack.c.b16 %v1290, %v1288
    %v1325 = vpack.c.b16 %v1291, %v1289
    %v1326 = vpack.c.b16 %v1294, %v1292
    %v1327 = vpack.c.b16 %v1295, %v1293
    %1360 = vmatprep.subr.bf16.mxu0 %v1311
    %1361 = vmatpush1.bf16.msra.mxu0 %v1310
    %1362 = vmatprep.subr.bf16.mxu0 %v1309
    %1363 = vmatpush1.bf16.msra.mxu0 %v1308
    %1364 = vmatprep.subr.bf16.mxu0 %v1307
    %1365 = vmatpush1.bf16.msra.mxu0 %v1306
    %1366 = vmatprep.subr.bf16.mxu0 %v1305
    %1367 = vmatpush1.bf16.msra.mxu0 %v1304
    %1368 = vmatprep.subr.bf16.mxu0 %v1303
    %1369 = vmatpush1.bf16.msra.mxu0 %v1302
    %1370 = vmatprep.subr.bf16.mxu0 %v1301
    %1371 = vmatpush1.bf16.msra.mxu0 %v1300
    %1372 = vmatprep.subr.bf16.mxu0 %v1299
    %1373 = vmatpush1.bf16.msra.mxu0 %v1298
    %1374 = vmatprep.subr.bf16.mxu0 %v1297
    %1375 = vmatpush1.bf16.msra.mxu0 %v1296
    %1376 = vmatprep.subr.bf16.mxu0 %v1327
    %1377 = vmatpush2.bf16.msra.mxu0 %v1326
    %1378 = vmatprep.subr.bf16.mxu0 %v1325
    %1379 = vmatpush2.bf16.msra.mxu0 %v1324
    %1380 = vmatprep.subr.bf16.mxu0 %v1323
    %1381 = vmatpush2.bf16.msra.mxu0 %v1322
    %1382 = vmatprep.subr.bf16.mxu0 %v1321
    %1383 = vmatpush2.bf16.msra.mxu0 %v1320
    %1384 = vmatprep.subr.bf16.mxu0 %v1319
    %1385 = vmatpush2.bf16.msra.mxu0 %v1318
    %1386 = vmatprep.subr.bf16.mxu0 %v1317
    %1387 = vmatpush2.bf16.msra.mxu0 %v1316
    %1388 = vmatprep.subr.bf16.mxu0 %v1315
    %1389 = vmatpush2.bf16.msra.mxu0 %v1314
    %1390 = vmatprep.subr.bf16.mxu0 %v1313
    %1391 = vmatpush2.bf16.msra.mxu0 %v1312
    %1392 = vmatprep.mubr.bf16.mxu0 %v1155
    %1393 = vmatmul.mubr.bf16.gmra.mxu0 %v1154
    %v1394 = vpop.f32.mrf.mxu0
    %v1395 = vadd.f32 %v1193, %v1394
    %v1396 = vpop.f32.mrf.mxu0
    %v1397 = vadd.f32 %v1197, %v1396
    %v1398 = vpop.f32.mrf.mxu0
    %v1399 = vpop.f32.mrf.mxu0
    %1400 = vdwg.mxu0
    %v1401 = vmul.f32 %v1395, 0.01
    %v1402 = vmul.f32 %v1397, 0.01
    %v1403 = vmax.f32 %v1395, %v1401
    %v1404 = vmax.f32 %v1397, %v1402
    %v1405 = vpack.c.bf16 %v1403, %v1403
    %v1406 = vpack.c.bf16 %v1404, %v1404
    %v1407 = vld [vmem:[%s7 + $0xa] sm:$0x1]
    %v1408 = vld [vmem:[#allocation9] sm:$0xf]
    %v1409 = vld [vmem:[#allocation9 + $0x4] sm:$0xf]
    %v1410 = vld [vmem:[#allocation9 + $0x8] sm:$0xf]
    %v1411 = vld [vmem:[#allocation9 + $0xc] sm:$0xf]
    %v1412 = vld [vmem:[#allocation9 + $0x10] sm:$0xf]
    %v1413 = vld [vmem:[#allocation9 + $0x14] sm:$0xf]
    %v1414 = vld [vmem:[#allocation9 + $0x18] sm:$0xf]
    %v1415 = vld [vmem:[#allocation9 + $0x1c] sm:$0xf]
    %v1416 = vld [vmem:[#allocation9 + $0x20] sm:$0xf]
    %v1417 = vld [vmem:[#allocation9 + $0x24] sm:$0xf]
    %v1418 = vld [vmem:[#allocation9 + $0x28] sm:$0xf]
    %v1419 = vld [vmem:[#allocation9 + $0x2c] sm:$0xf]
    %v1420 = vld [vmem:[#allocation9 + $0x30] sm:$0xf]
    %v1421 = vld [vmem:[#allocation9 + $0x34] sm:$0xf]
    %v1422 = vld [vmem:[#allocation9 + $0x38] sm:$0xf]
    %v1423 = vld [vmem:[#allocation9 + $0x3c] sm:$0xf]
    %v1424 = vld [vmem:[#allocation9 + $0x40] sm:$0xf]
    %v1425 = vld [vmem:[#allocation9 + $0x44] sm:$0xf]
    %v1426 = vld [vmem:[#allocation9 + $0x48] sm:$0xf]
    %v1427 = vld [vmem:[#allocation9 + $0x4c] sm:$0xf]
    %v1428 = vld [vmem:[#allocation9 + $0x50] sm:$0xf]
    %v1429 = vld [vmem:[#allocation9 + $0x54] sm:$0xf]
    %v1430 = vld [vmem:[#allocation9 + $0x58] sm:$0xf]
    %v1431 = vld [vmem:[#allocation9 + $0x5c] sm:$0xf]
    %v1432 = vld [vmem:[#allocation9 + $0x60] sm:$0xf]
    %v1433 = vld [vmem:[#allocation9 + $0x64] sm:$0xf]
    %v1434 = vld [vmem:[#allocation9 + $0x68] sm:$0xf]
    %v1435 = vld [vmem:[#allocation9 + $0x6c] sm:$0xf]
    %v1436 = vld [vmem:[#allocation9 + $0x70] sm:$0xf]
    %v1437 = vld [vmem:[#allocation9 + $0x74] sm:$0xf]
    %v1438 = vld [vmem:[#allocation9 + $0x78] sm:$0xf]
    %v1439 = vld [vmem:[#allocation9 + $0x7c] sm:$0xf]
    %v1441 = vlaneseq
    %v1442 = vshrl.u32 %v1441, 7
    %v1443 = vsub.s32 0, %v1442
    %v1444 = vrot.slane %v1407, %v1443
    %v1478 = vunpack.c.l.b16 %v1408
    %v1479 = vunpack.c.l.b16 %v1409
    %v1480 = vunpack.c.l.b16 %v1410
    %v1481 = vunpack.c.l.b16 %v1411
    %v1482 = vunpack.c.l.b16 %v1412
    %v1483 = vunpack.c.l.b16 %v1413
    %v1484 = vunpack.c.l.b16 %v1414
    %v1485 = vunpack.c.l.b16 %v1415
    %v1486 = vunpack.c.l.b16 %v1416
    %v1487 = vunpack.c.l.b16 %v1417
    %v1488 = vunpack.c.l.b16 %v1418
    %v1489 = vunpack.c.l.b16 %v1419
    %v1490 = vunpack.c.l.b16 %v1420
    %v1491 = vunpack.c.l.b16 %v1421
    %v1492 = vunpack.c.l.b16 %v1422
    %v1493 = vunpack.c.l.b16 %v1423
    %v1494 = vunpack.c.l.b16 %v1424
    %v1495 = vunpack.c.l.b16 %v1425
    %v1496 = vunpack.c.l.b16 %v1426
    %v1497 = vunpack.c.l.b16 %v1427
    %v1498 = vunpack.c.l.b16 %v1428
    %v1499 = vunpack.c.l.b16 %v1429
    %v1500 = vunpack.c.l.b16 %v1430
    %v1501 = vunpack.c.l.b16 %v1431
    %v1502 = vunpack.c.l.b16 %v1432
    %v1503 = vunpack.c.l.b16 %v1433
    %v1504 = vunpack.c.l.b16 %v1434
    %v1505 = vunpack.c.l.b16 %v1435
    %v1506 = vunpack.c.l.b16 %v1436
    %v1507 = vunpack.c.l.b16 %v1437
    %v1508 = vunpack.c.l.b16 %v1438
    %v1509 = vunpack.c.l.b16 %v1439
    %v1510 = vpack.c.b16 %v1479, %v1478
    %v1511 = vpack.c.b16 %v1481, %v1480
    %v1512 = vpack.c.b16 %v1483, %v1482
    %v1513 = vpack.c.b16 %v1485, %v1484
    %v1514 = vpack.c.b16 %v1487, %v1486
    %v1515 = vpack.c.b16 %v1489, %v1488
    %v1516 = vpack.c.b16 %v1491, %v1490
    %v1517 = vpack.c.b16 %v1493, %v1492
    %v1518 = vpack.c.b16 %v1495, %v1494
    %v1519 = vpack.c.b16 %v1497, %v1496
    %v1520 = vpack.c.b16 %v1499, %v1498
    %v1521 = vpack.c.b16 %v1501, %v1500
    %v1522 = vpack.c.b16 %v1503, %v1502
    %v1523 = vpack.c.b16 %v1505, %v1504
    %v1524 = vpack.c.b16 %v1507, %v1506
    %v1525 = vpack.c.b16 %v1509, %v1508
    %1542 = vmatprep.subr.bf16.mxu0 0
    %1543 = vmatpush1.bf16.msra.mxu0 %v1517
    %1544 = vmatprep.subr.bf16.mxu0 0
    %1545 = vmatpush1.bf16.msra.mxu0 %v1516
    %1546 = vmatprep.subr.bf16.mxu0 0
    %1547 = vmatpush1.bf16.msra.mxu0 %v1515
    %1548 = vmatprep.subr.bf16.mxu0 0
    %1549 = vmatpush1.bf16.msra.mxu0 %v1514
    %1550 = vmatprep.subr.bf16.mxu0 0
    %1551 = vmatpush1.bf16.msra.mxu0 %v1513
    %1552 = vmatprep.subr.bf16.mxu0 0
    %1553 = vmatpush1.bf16.msra.mxu0 %v1512
    %1554 = vmatprep.subr.bf16.mxu0 0
    %1555 = vmatpush1.bf16.msra.mxu0 %v1511
    %1556 = vmatprep.subr.bf16.mxu0 0
    %1557 = vmatpush1.bf16.msra.mxu0 %v1510
    %1558 = vmatprep.subr.bf16.mxu0 0
    %1559 = vmatpush2.bf16.msra.mxu0 %v1525
    %1560 = vmatprep.subr.bf16.mxu0 0
    %1561 = vmatpush2.bf16.msra.mxu0 %v1524
    %1562 = vmatprep.subr.bf16.mxu0 0
    %1563 = vmatpush2.bf16.msra.mxu0 %v1523
    %1564 = vmatprep.subr.bf16.mxu0 0
    %1565 = vmatpush2.bf16.msra.mxu0 %v1522
    %1566 = vmatprep.subr.bf16.mxu0 0
    %1567 = vmatpush2.bf16.msra.mxu0 %v1521
    %1568 = vmatprep.subr.bf16.mxu0 0
    %1569 = vmatpush2.bf16.msra.mxu0 %v1520
    %1570 = vmatprep.subr.bf16.mxu0 0
    %1571 = vmatpush2.bf16.msra.mxu0 %v1519
    %1572 = vmatprep.subr.bf16.mxu0 0
    %1573 = vmatpush2.bf16.msra.mxu0 %v1518
    %1574 = vmatprep.mubr.bf16.mxu0 %v1406
    %1575 = vmatmul.mubr.bf16.gmra.mxu0 %v1405
    %v1576 = vpop.f32.mrf.mxu0
    %v1577 = vadd.f32 %v1444, %v1576
    %v1578 = vpop.f32.mrf.mxu0
    %v1579 = vpop.f32.mrf.mxu0
    %v1580 = vpop.f32.mrf.mxu0
    %1581 = vdwg.mxu0
    %v1582 = vmul.f32 %v1577, 0.01
    %v1583 = vmax.f32 %v1577, %v1582
    %v1584 = vpack.c.bf16 %v1583, %v1583
    %v1585 = vld [vmem:[%s7 + $0xb] sm:$0x1]
    %v1586 = vld [vmem:[#allocation10] sm:$0xf]
    %v1587 = vld [vmem:[#allocation10 + $0x4] sm:$0xf]
    %v1588 = vld [vmem:[#allocation10 + $0x8] sm:$0xf]
    %v1589 = vld [vmem:[#allocation10 + $0xc] sm:$0xf]
    %v1590 = vld [vmem:[#allocation10 + $0x10] sm:$0xf]
    %v1591 = vld [vmem:[#allocation10 + $0x14] sm:$0xf]
    %v1592 = vld [vmem:[#allocation10 + $0x18] sm:$0xf]
    %v1593 = vld [vmem:[#allocation10 + $0x1c] sm:$0xf]
    %v1594 = vld [vmem:[#allocation10 + $0x20] sm:$0xf]
    %v1595 = vld [vmem:[#allocation10 + $0x24] sm:$0xf]
    %v1596 = vld [vmem:[#allocation10 + $0x28] sm:$0xf]
    %v1597 = vld [vmem:[#allocation10 + $0x2c] sm:$0xf]
    %v1598 = vld [vmem:[#allocation10 + $0x30] sm:$0xf]
    %v1599 = vld [vmem:[#allocation10 + $0x34] sm:$0xf]
    %v1600 = vld [vmem:[#allocation10 + $0x38] sm:$0xf]
    %v1601 = vld [vmem:[#allocation10 + $0x3c] sm:$0xf]
    %v1603 = vlaneseq
    %v1604 = vshrl.u32 %v1603, 7
    %v1605 = vsub.s32 0, %v1604
    %v1606 = vrot.slane %v1585, %v1605
    %v1624 = vunpack.c.l.b16 %v1586
    %v1625 = vunpack.c.l.b16 %v1587
    %v1626 = vunpack.c.l.b16 %v1588
    %v1627 = vunpack.c.l.b16 %v1589
    %v1628 = vunpack.c.l.b16 %v1590
    %v1629 = vunpack.c.l.b16 %v1591
    %v1630 = vunpack.c.l.b16 %v1592
    %v1631 = vunpack.c.l.b16 %v1593
    %v1632 = vunpack.c.l.b16 %v1594
    %v1633 = vunpack.c.l.b16 %v1595
    %v1634 = vunpack.c.l.b16 %v1596
    %v1635 = vunpack.c.l.b16 %v1597
    %v1636 = vunpack.c.l.b16 %v1598
    %v1637 = vunpack.c.l.b16 %v1599
    %v1638 = vunpack.c.l.b16 %v1600
    %v1639 = vunpack.c.l.b16 %v1601
    %v1640 = vpack.c.b16 %v1625, %v1624
    %v1641 = vpack.c.b16 %v1627, %v1626
    %v1642 = vpack.c.b16 %v1629, %v1628
    %v1643 = vpack.c.b16 %v1631, %v1630
    %v1644 = vpack.c.b16 %v1633, %v1632
    %v1645 = vpack.c.b16 %v1635, %v1634
    %v1646 = vpack.c.b16 %v1637, %v1636
    %v1647 = vpack.c.b16 %v1639, %v1638
    %1656 = vmatprep.subr.bf16.mxu0 0
    %1657 = vmatpush1.bf16.msra.mxu0 %v1647
    %1658 = vmatprep.subr.bf16.mxu0 0
    %1659 = vmatpush1.bf16.msra.mxu0 %v1646
    %1660 = vmatprep.subr.bf16.mxu0 0
    %1661 = vmatpush1.bf16.msra.mxu0 %v1645
    %1662 = vmatprep.subr.bf16.mxu0 0
    %1663 = vmatpush1.bf16.msra.mxu0 %v1644
    %1664 = vmatprep.subr.bf16.mxu0 0
    %1665 = vmatpush1.bf16.msra.mxu0 %v1643
    %1666 = vmatprep.subr.bf16.mxu0 0
    %1667 = vmatpush1.bf16.msra.mxu0 %v1642
    %1668 = vmatprep.subr.bf16.mxu0 0
    %1669 = vmatpush1.bf16.msra.mxu0 %v1641
    %1670 = vmatprep.subr.bf16.mxu0 0
    %1671 = vmatpush1.bf16.msra.mxu0 %v1640
    %1672 = vmatprep.subr.bf16.mxu0 0
    %1673 = vmatpush2.bf16.msra.mxu0 0
    %1674 = vmatprep.subr.bf16.mxu0 0
    %1675 = vmatpush2.bf16.msra.mxu0 0
    %1676 = vmatprep.subr.bf16.mxu0 0
    %1677 = vmatpush2.bf16.msra.mxu0 0
    %1678 = vmatprep.subr.bf16.mxu0 0
    %1679 = vmatpush2.bf16.msra.mxu0 0
    %1680 = vmatprep.subr.bf16.mxu0 0
    %1681 = vmatpush2.bf16.msra.mxu0 0
    %1682 = vmatprep.subr.bf16.mxu0 0
    %1683 = vmatpush2.bf16.msra.mxu0 0
    %1684 = vmatprep.subr.bf16.mxu0 0
    %1685 = vmatpush2.bf16.msra.mxu0 0
    %1686 = vmatprep.subr.bf16.mxu0 0
    %1687 = vmatpush2.bf16.msra.mxu0 0
    %1688 = vmatprep.mubr.bf16.mxu0 0
    %1689 = vmatmul.mubr.bf16.gmra.mxu0 %v1584
    %v1690 = vpop.f32.mrf.mxu0
    %v1691 = vadd.f32 %v1606, %v1690
    %v1692 = vpop.f32.mrf.mxu0
    %v1693 = vpop.f32.mrf.mxu0
    %v1694 = vpop.f32.mrf.mxu0
    %1695 = vdwg.mxu0
    %v1696 = vxor.u32 %v1691, 2147483648
    %v1697 = vmul.f32 %v1696, 1.442695
    %v1698 = vpow.pop %v1697
    %v1699 = vadd.f32 %v1698, 1.0
    %v1700 = vrcp.pop %v1699
    %v1701 = vmul.f32 1.0, %v1700
    %vm1702 = vcmask 64512
    %1703 = vst.msk [vmem:[%s8] sm:$0xff] %vm1702, %v1701
    // Predicated region
    $region58: #{net_forward.1} parent=1 // pred_check
      _
    $region59: #{net_forward.1} parent=1 // pred_check_branch
      %1705 = sbr.rel (0) target = $region61
    $region60: #{net_forward.1} parent=1 // pred_region
      _
    $region61: #{net_forward.1} parent=1 // pred_fallthru
      _
    // Predicated region
    $region62: #{net_forward.1} parent=1 // pred_check
      _
    $region63: #{net_forward.1} parent=1 // pred_check_branch
      %1707 = sbr.rel (0) target = $region65
    $region64: #{net_forward.1} parent=1 // pred_region
      _
    $region65: #{net_forward.1} parent=1 // pred_fallthru
      _
    %1708 = vsyncpa [#allocation3], 1
    %1709 = vsyncpa [#allocation5], 1
    %1710 = vsyncpa [#allocation8], 1
    %1711 = vsyncpa [#allocation11], 1

</llo_original>
